<compile_context>
chip_gen: v7x
topology: tpu7x:2x2x1
jax: 0.10.0
libtpu: 0.0.40
codegen_flags: <defaults>
</compile_context>

<pallas_src>
import functools

import jax
import jax.numpy as jnp
from jax.experimental import pallas as pl
from jax.experimental.pallas import tpu as pltpu

NEG_SLOPE = 0.01  # nn.LeakyReLU default negative slope


def _round_up(n, m):
    return ((n + m - 1) // m) * m


def _leaky_relu(h):
    return jnp.where(h > 0, h, NEG_SLOPE * h)


def _vae_fused_kernel(x_ref, eps_ref,
                      w1e_ref, b1e_ref, w2e_ref, b2e_ref,
                      w1d_ref, b1d_ref, w2d_ref, b2d_ref,
                      grp_ref, grpT_ref,
                      stats_ref, mu_x_ref, *, lat_pad):
    # ----- encoder MLP (bf16 MXU inputs, f32 accumulation) -----
    x = x_ref[...]
    if x.dtype != jnp.bfloat16:           # accept bf16 x from upstream as-is
        x = x.astype(jnp.bfloat16)
    h = jnp.dot(x, w1e_ref[...], preferred_element_type=jnp.float32) + b1e_ref[...]
    h = _leaky_relu(h)
    ze = (jnp.dot(h.astype(jnp.bfloat16), w2e_ref[...],
                  preferred_element_type=jnp.float32) + b2e_ref[...])

    # Lane-dense combined (TB, 2*Lp) output; torch.chunk happens in wrapper.
    stats_ref[...] = ze

    # ----- reparameterization: z = mu + exp(0.5 * log_var) * eps  (f32) -----
    # Split at lat_pad (a multiple of 128) -> clean vreg boundary, no masked
    # selects.  Padded latent columns are exactly zero (zero weight columns,
    # zero eps columns), so they contribute nothing to the decoder.
    mu_z = ze[:, :lat_pad]
    log_var = ze[:, lat_pad:]
    z = mu_z + jnp.exp(0.5 * log_var) * eps_ref[...]

    # ----- decoder MLP (K = lat_pad = 128 -> full MXU depth utilization) ---
    hd = (jnp.dot(z.astype(jnp.bfloat16), w1d_ref[...],
                  preferred_element_type=jnp.float32) + b1d_ref[...])
    hd = _leaky_relu(hd)
    logits = (jnp.dot(hd.astype(jnp.bfloat16), w2d_ref[...],
                      preferred_element_type=jnp.float32) + b2d_ref[...])

    # ----- fused grouped softmax (== softmax over num_vals), lane-dense ----
    # Row-wide max upper-bounds each group's max -> numerically stable.
    m = jnp.max(logits, axis=-1, keepdims=True)
    e = jnp.exp(logits - m)                                    # f32 (TB, out)
    # Per-group sums via MXU 0/1 indicator matmul (rides the idle MXU slot),
    # broadcast back with the transposed indicator, divide via EUP reciprocal.
    gsum = jnp.dot(e.astype(jnp.bfloat16), grp_ref[...],
                   preferred_element_type=jnp.float32)         # (TB, groups)
    den = jnp.dot(gsum.astype(jnp.bfloat16), grpT_ref[...],
                  preferred_element_type=jnp.float32)          # (TB, out)
    mu_x_ref[...] = e * pl.reciprocal(den, approx=True)        # lane-dense store


def _pick_tb(B):
    """Batch tile: multiple of 16 (bf16 sublane packing), <=256 (MXU M on
    v6e/v7x); when one tile would cover the whole batch but the batch is big
    enough, halve so grid>=2 and the parallel axis shards across 2 TCs."""
    tb = min(256, _round_up(B, 16))
    if (B + tb - 1) // tb == 1 and B > 16:
        tb = _round_up((B + 1) // 2, 16)
    return tb


def vae_forward(x, eps, params_packed, *, latent_dim, d, num_vals):
    """Returns (mu_z, log_var_z, mu_x) exactly like VariationalAutoEncoder.forward.

    `params_packed` must come from `pack_params` (latent-padded layout).
    """
    B = x.shape[0]
    x_flat = x.reshape(B, -1)                 # nn.Flatten (row-major, NCHW)
    in_dim = x_flat.shape[1]
    n_groups = d * d
    out_dim = n_groups * num_vals
    Lp = _round_up(latent_dim, 128)           # padded latent width

    # Only the tiny eps gets padded (columns -> Lp, zeros so padded z == 0).
    if eps.shape[1] != Lp:
        eps = jnp.pad(eps, ((0, 0), (0, Lp - eps.shape[1])))

    TB = _pick_tb(B)
    grid = (B + TB - 1) // TB                 # ragged tail handled by masking

    w1e, b1e, w2e, b2e, w1d, b1d, w2d, b2d = params_packed

    # 0/1 group-indicator (out_dim, n_groups) and its transpose, bf16.
    col_grp = jnp.arange(out_dim, dtype=jnp.int32) // num_vals
    G = (col_grp[:, None] == jnp.arange(n_groups, dtype=jnp.int32)[None, :]
         ).astype(jnp.bfloat16)
    GT = G.T

    row_spec = lambda cols: pl.BlockSpec((TB, cols), lambda i: (i, 0))
    pinned = lambda arr: pl.BlockSpec(arr.shape, lambda i: (0, 0))  # VMEM-resident
    # NOTE: pinned weights could be single-buffered (pipeline_mode) when
    # hidden/in_dim grow; negligible at these sizes so left at the default.

    # VMEM budget: raise the scoped limit only if the estimate exceeds the
    # 32 MiB default (keeps v7x's 64 MiB physical ceiling in mind).
    def _nbytes(shape, dtype):
        n = 1
        for s in shape:
            n *= int(s)
        return n * jnp.dtype(dtype).itemsize

    vmem_est = 2 * (_nbytes((TB, in_dim), x_flat.dtype)
                    + _nbytes((TB, Lp), jnp.float32)
                    + _nbytes((TB, 2 * Lp), jnp.float32)
                    + _nbytes((TB, out_dim), jnp.float32))
    vmem_est += 2 * sum(_nbytes(a.shape, a.dtype) for a in
                        (w1e, b1e, w2e, b2e, w1d, b1d, w2d, b2d, G, GT))
    vmem_est = int(1.5 * vmem_est) + (4 << 20)   # headroom for intermediates
    cp_kwargs = dict(dimension_semantics=("parallel",))
    if vmem_est > (32 << 20):
        cp_kwargs["vmem_limit_bytes"] = min(vmem_est, 64 << 20)

    stats, mu_x_flat = pl.pallas_call(
        functools.partial(_vae_fused_kernel, lat_pad=Lp),
        grid=(grid,),
        out_shape=(
            jax.ShapeDtypeStruct((B, 2 * Lp), jnp.float32),   # [mu|pad|logvar|pad]
            jax.ShapeDtypeStruct((B, out_dim), jnp.float32),  # mu_x (flat)
        ),
        in_specs=[
            row_spec(in_dim),            # x
            row_spec(Lp),                # eps (lane-dense, padded to Lp)
            pinned(w1e), pinned(b1e),
            pinned(w2e), pinned(b2e),
            pinned(w1d), pinned(b1d),
            pinned(w2d), pinned(b2d),
            pinned(G), pinned(GT),
        ],
        out_specs=(row_spec(2 * Lp), row_spec(out_dim)),
        compiler_params=pltpu.CompilerParams(**cp_kwargs),
    )(x_flat, eps, w1e, b1e, w2e, b2e, w1d, b1d, w2d, b2d, G, GT)

    # torch.chunk(z, 2, dim=1) and Decoder.decode's view — free XLA glue.
    mu_z = stats[:, :latent_dim]
    log_var_z = stats[:, Lp:Lp + latent_dim]
    mu_x = mu_x_flat.reshape(B, n_groups, num_vals)
    return mu_z, log_var_z, mu_x


def pack_params(params, *, latent_dim, hidden):
    """Re-lay the encoder/decoder weights with the latent dim padded to 128:
    w2e columns -> [mu | 0 | log_var | 0] (each half Lp wide), w1d gets zero
    rows for padded latent dims.  Purely a layout change (semantics-free)."""
    w1e, b1e, w2e, b2e, w1d, b1d, w2d, b2d = params
    Lp = _round_up(latent_dim, 128)
    pc = Lp - latent_dim
    w2e_p = jnp.concatenate(
        [w2e[:, :latent_dim], jnp.zeros((hidden, pc), w2e.dtype),
         w2e[:, latent_dim:], jnp.zeros((hidden, pc), w2e.dtype)], axis=1)
    b2e_p = jnp.concatenate(
        [b2e[:, :latent_dim], jnp.zeros((1, pc), b2e.dtype),
         b2e[:, latent_dim:], jnp.zeros((1, pc), b2e.dtype)], axis=1)
    w1d_p = jnp.concatenate([w1d, jnp.zeros((pc, hidden), w1d.dtype)], axis=0)
    return (w1e, b1e, w2e_p, b2e_p, w1d_p, b1d, w2d, b2d)


def vae_reference(x, eps, params, *, latent_dim, d, num_vals):
    """Pure-JAX reference (unpadded params, exact softmax)."""
    w1e, b1e, w2e, b2e, w1d, b1d, w2d, b2d = params
    B = x.shape[0]
    xf = x.reshape(B, -1).astype(jnp.bfloat16)
    h = jnp.dot(xf, w1e, preferred_element_type=jnp.float32) + b1e
    h = _leaky_relu(h)
    ze = jnp.dot(h.astype(jnp.bfloat16), w2e, preferred_element_type=jnp.float32) + b2e
    mu_z, log_var = ze[:, :latent_dim], ze[:, latent_dim:]
    z = mu_z + jnp.exp(0.5 * log_var) * eps
    hd = jnp.dot(z.astype(jnp.bfloat16), w1d, preferred_element_type=jnp.float32) + b1d
    hd = _leaky_relu(hd)
    logits = jnp.dot(hd.astype(jnp.bfloat16), w2d, preferred_element_type=jnp.float32) + b2d
    mu_x = jax.nn.softmax(logits.reshape(B, d * d, num_vals), axis=-1)
    return mu_z, log_var, mu_x


def init_params(key, *, in_dim, hidden, latent_dim, d, num_vals):
    """Deterministic synthetic parameters (PyTorch-shaped): bf16 W, f32 b."""
    k1, k2, k3, k4, kb = jax.random.split(key, 5)
    b1, b2, b3, b4 = jax.random.split(kb, 4)

    def lin(k, fan_in, fan_out):
        w = jax.random.normal(k, (fan_in, fan_out), jnp.float32) / jnp.sqrt(fan_in)
        return w.astype(jnp.bfloat16)

    def bias(k, n):
        return 0.1 * jax.random.normal(k, (1, n), jnp.float32)

    out_dim = d * d * num_vals
    return (
        lin(k1, in_dim, hidden),          bias(b1, hidden),
        lin(k2, hidden, 2 * latent_dim),  bias(b2, 2 * latent_dim),
        lin(k3, latent_dim, hidden),      bias(b3, hidden),
        lin(k4, hidden, out_dim),         bias(b4, out_dim),
    )


if __name__ == "__main__":
    B, C, H, W = 2, 4, 16, 16        # x: NCHW
    latent_dim = 64                  # L  (padded to Lp=128 inside the kernel)
    hidden = 128                     # M
    d = 4                            # decoder spatial size -> mu_x has d*d rows
    num_vals = 16                    # VariationalAutoEncoder(num_vals=16) (small)

    key = jax.random.PRNGKey(0)
    kx, keps, kparams = jax.random.split(key, 3)

    x = jax.random.normal(kx, (B, C, H, W), jnp.float32)
    # eps ~ N(0,1): deterministic stand-in for torch.randn_like in reparameterization
    eps = jax.random.normal(keps, (B, latent_dim), jnp.float32)

    params = init_params(kparams, in_dim=C * H * W, hidden=hidden,
                         latent_dim=latent_dim, d=d, num_vals=num_vals)
    params_packed = jax.tree_util.tree_map(
        lambda a: a, pack_params(params, latent_dim=latent_dim, hidden=hidden))

    fwd = jax.jit(functools.partial(vae_forward, latent_dim=latent_dim,
                                    d=d, num_vals=num_vals))
    mu_z, log_var_z, mu_x = fwd(x, eps, params_packed)
    jax.block_until_ready((mu_z, log_var_z, mu_x))

    # shape / validity checks
    assert mu_z.shape == (B, latent_dim)
    assert log_var_z.shape == (B, latent_dim)
    assert mu_x.shape == (B, d * d, num_vals)
    assert bool(jnp.all(jnp.isfinite(mu_x)))
    assert bool(jnp.all(mu_x >= 0))
    assert bool(jnp.allclose(jnp.sum(mu_x, axis=-1), 1.0, atol=2e-2))

    # pure-JAX reference check (loose tolerance: bf16 matmuls + approx recip)
    r_mu_z, r_log_var, r_mu_x = vae_reference(
        x, eps, params, latent_dim=latent_dim, d=d, num_vals=num_vals)
    assert bool(jnp.allclose(mu_z, r_mu_z, atol=2e-2, rtol=2e-2))
    assert bool(jnp.allclose(log_var_z, r_log_var, atol=2e-2, rtol=2e-2))
    assert bool(jnp.allclose(mu_x, r_mu_x, atol=2e-2, rtol=2e-2))

    # TODO(synk): Decoder.sample (torch.multinomial) is not reached by
    # VariationalAutoEncoder.forward, so it is intentionally not implemented.
    print("KERNEL_OK")
</pallas_src>

<mosaic_0001>
module attributes {stable_mosaic.version = 11 : i64} {
  func.func @_vae_fused_kernel(%arg0: i32, %arg1: memref<16x1024xf32, #tpu.memory_space<vmem>>, %arg2: memref<16x128xf32, #tpu.memory_space<vmem>>, %arg3: memref<1024x128xbf16, #tpu.memory_space<vmem>>, %arg4: memref<1x128xf32, #tpu.memory_space<vmem>>, %arg5: memref<128x256xbf16, #tpu.memory_space<vmem>>, %arg6: memref<1x256xf32, #tpu.memory_space<vmem>>, %arg7: memref<128x128xbf16, #tpu.memory_space<vmem>>, %arg8: memref<1x128xf32, #tpu.memory_space<vmem>>, %arg9: memref<128x256xbf16, #tpu.memory_space<vmem>>, %arg10: memref<1x256xf32, #tpu.memory_space<vmem>>, %arg11: memref<256x16xbf16, #tpu.memory_space<vmem>>, %arg12: memref<16x256xbf16, #tpu.memory_space<vmem>>, %arg13: memref<16x256xf32, #tpu.memory_space<vmem>>, %arg14: memref<16x256xf32, #tpu.memory_space<vmem>>) attributes {dimension_semantics = [#tpu.dimension_semantics<parallel>], iteration_bounds = array<i64: 1>, scalar_prefetch = 0 : i64, scratch_operands = 0 : i64, tpu.core_type = #tpu.core_type<tc>, window_params = [{transform_indices = @transform_0, window_bounds = array<i64: 16, 1024>}, {transform_indices = @transform_1, window_bounds = array<i64: 16, 128>}, {pipeline_mode = #tpu.pipeline_mode<synchronous>, transform_indices = @transform_2, window_bounds = array<i64: 1024, 128>}, {pipeline_mode = #tpu.pipeline_mode<synchronous>, transform_indices = @transform_3, window_bounds = array<i64: 1, 128>}, {pipeline_mode = #tpu.pipeline_mode<synchronous>, transform_indices = @transform_4, window_bounds = array<i64: 128, 256>}, {pipeline_mode = #tpu.pipeline_mode<synchronous>, transform_indices = @transform_5, window_bounds = array<i64: 1, 256>}, {pipeline_mode = #tpu.pipeline_mode<synchronous>, transform_indices = @transform_6, window_bounds = array<i64: 128, 128>}, {pipeline_mode = #tpu.pipeline_mode<synchronous>, transform_indices = @transform_7, window_bounds = array<i64: 1, 128>}, {pipeline_mode = #tpu.pipeline_mode<synchronous>, transform_indices = @transform_8, window_bounds = array<i64: 128, 256>}, {pipeline_mode = #tpu.pipeline_mode<synchronous>, transform_indices = @transform_9, window_bounds = array<i64: 1, 256>}, {pipeline_mode = #tpu.pipeline_mode<synchronous>, transform_indices = @transform_10, window_bounds = array<i64: 256, 16>}, {pipeline_mode = #tpu.pipeline_mode<synchronous>, transform_indices = @transform_11, window_bounds = array<i64: 16, 256>}, {transform_indices = @transform_12, window_bounds = array<i64: 16, 256>}, {transform_indices = @transform_13, window_bounds = array<i64: 16, 256>}]} {
    %c0 = arith.constant 0 : index
    %c0_0 = arith.constant 0 : index
    %0 = vector.load %arg1[%c0, %c0_0] : memref<16x1024xf32, #tpu.memory_space<vmem>>, vector<16x1024xf32>
    %1 = arith.truncf %0 : vector<16x1024xf32> to vector<16x1024xbf16>
    %c0_1 = arith.constant 0 : index
    %c0_2 = arith.constant 0 : index
    %2 = vector.load %arg3[%c0_1, %c0_2] : memref<1024x128xbf16, #tpu.memory_space<vmem>>, vector<1024x128xbf16>
    %cst = arith.constant dense<0.000000e+00> : vector<16x128xf32>
    %3 = tpu.matmul %1, %2, %cst {dimension_numbers = #tpu.dot_dimension_numbers<[1], [0], [0], [1], [0, 0, 1, 1], [], []>} : vector<16x1024xbf16>, vector<1024x128xbf16>, vector<16x128xf32> -> vector<16x128xf32>
    %c0_3 = arith.constant 0 : index
    %c0_4 = arith.constant 0 : index
    %4 = vector.load %arg4[%c0_3, %c0_4] : memref<1x128xf32, #tpu.memory_space<vmem>>, vector<1x128xf32>
    %5 = vector.broadcast %4 : vector<1x128xf32> to vector<16x128xf32>
    %6 = arith.addf %3, %5 : vector<16x128xf32>
    %cst_5 = arith.constant 0.000000e+00 : f32
    %7 = vector.broadcast %cst_5 : f32 to vector<16x128xf32>
    %8 = arith.cmpf ogt, %6, %7 : vector<16x128xf32>
    %cst_6 = arith.constant 0.00999999977 : f32
    %9 = vector.broadcast %cst_6 : f32 to vector<16x128xf32>
    %10 = arith.mulf %9, %6 : vector<16x128xf32>
    %11 = arith.select %8, %6, %10 : vector<16x128xi1>, vector<16x128xf32>
    %12 = arith.truncf %11 : vector<16x128xf32> to vector<16x128xbf16>
    %c0_7 = arith.constant 0 : index
    %c0_8 = arith.constant 0 : index
    %13 = vector.load %arg5[%c0_7, %c0_8] : memref<128x256xbf16, #tpu.memory_space<vmem>>, vector<128x256xbf16>
    %cst_9 = arith.constant dense<0.000000e+00> : vector<16x256xf32>
    %14 = tpu.matmul %12, %13, %cst_9 {dimension_numbers = #tpu.dot_dimension_numbers<[1], [0], [0], [1], [0, 0, 1, 1], [], []>} : vector<16x128xbf16>, vector<128x256xbf16>, vector<16x256xf32> -> vector<16x256xf32>
    %c0_10 = arith.constant 0 : index
    %c0_11 = arith.constant 0 : index
    %15 = vector.load %arg6[%c0_10, %c0_11] : memref<1x256xf32, #tpu.memory_space<vmem>>, vector<1x256xf32>
    %16 = vector.broadcast %15 : vector<1x256xf32> to vector<16x256xf32>
    %17 = arith.addf %14, %16 : vector<16x256xf32>
    %c0_12 = arith.constant 0 : index
    %c0_13 = arith.constant 0 : index
    %18 = vector.load %arg13[%c0_12, %c0_13] : memref<16x256xf32, #tpu.memory_space<vmem>>, vector<16x256xf32>
    tpu.vector_store %arg13[%c0_12, %c0_13], %17 {strides = array<i32>} : memref<16x256xf32, #tpu.memory_space<vmem>>, vector<16x256xf32>,
    %19 = vector.extract_strided_slice %17 {offsets = [0, 0], sizes = [16, 128], strides = [1, 1]} : vector<16x256xf32> to vector<16x128xf32>
    %20 = vector.extract_strided_slice %17 {offsets = [0, 128], sizes = [16, 128], strides = [1, 1]} : vector<16x256xf32> to vector<16x128xf32>
    %cst_14 = arith.constant 5.000000e-01 : f32
    %21 = vector.broadcast %cst_14 : f32 to vector<16x128xf32>
    %22 = arith.mulf %21, %20 : vector<16x128xf32>
    %23 = math.exp %22 : vector<16x128xf32>
    %c0_15 = arith.constant 0 : index
    %c0_16 = arith.constant 0 : index
    %24 = vector.load %arg2[%c0_15, %c0_16] : memref<16x128xf32, #tpu.memory_space<vmem>>, vector<16x128xf32>
    %25 = arith.mulf %23, %24 : vector<16x128xf32>
    %26 = arith.addf %19, %25 : vector<16x128xf32>
    %27 = arith.truncf %26 : vector<16x128xf32> to vector<16x128xbf16>
    %c0_17 = arith.constant 0 : index
    %c0_18 = arith.constant 0 : index
    %28 = vector.load %arg7[%c0_17, %c0_18] : memref<128x128xbf16, #tpu.memory_space<vmem>>, vector<128x128xbf16>
    %cst_19 = arith.constant dense<0.000000e+00> : vector<16x128xf32>
    %29 = tpu.matmul %27, %28, %cst_19 {dimension_numbers = #tpu.dot_dimension_numbers<[1], [0], [0], [1], [0, 0, 1, 1], [], []>} : vector<16x128xbf16>, vector<128x128xbf16>, vector<16x128xf32> -> vector<16x128xf32>
    %c0_20 = arith.constant 0 : index
    %c0_21 = arith.constant 0 : index
    %30 = vector.load %arg8[%c0_20, %c0_21] : memref<1x128xf32, #tpu.memory_space<vmem>>, vector<1x128xf32>
    %31 = vector.broadcast %30 : vector<1x128xf32> to vector<16x128xf32>
    %32 = arith.addf %29, %31 : vector<16x128xf32>
    %cst_22 = arith.constant 0.000000e+00 : f32
    %33 = vector.broadcast %cst_22 : f32 to vector<16x128xf32>
    %34 = arith.cmpf ogt, %32, %33 : vector<16x128xf32>
    %cst_23 = arith.constant 0.00999999977 : f32
    %35 = vector.broadcast %cst_23 : f32 to vector<16x128xf32>
    %36 = arith.mulf %35, %32 : vector<16x128xf32>
    %37 = arith.select %34, %32, %36 : vector<16x128xi1>, vector<16x128xf32>
    %38 = arith.truncf %37 : vector<16x128xf32> to vector<16x128xbf16>
    %c0_24 = arith.constant 0 : index
    %c0_25 = arith.constant 0 : index
    %39 = vector.load %arg9[%c0_24, %c0_25] : memref<128x256xbf16, #tpu.memory_space<vmem>>, vector<128x256xbf16>
    %cst_26 = arith.constant dense<0.000000e+00> : vector<16x256xf32>
    %40 = tpu.matmul %38, %39, %cst_26 {dimension_numbers = #tpu.dot_dimension_numbers<[1], [0], [0], [1], [0, 0, 1, 1], [], []>} : vector<16x128xbf16>, vector<128x256xbf16>, vector<16x256xf32> -> vector<16x256xf32>
    %c0_27 = arith.constant 0 : index
    %c0_28 = arith.constant 0 : index
    %41 = vector.load %arg10[%c0_27, %c0_28] : memref<1x256xf32, #tpu.memory_space<vmem>>, vector<1x256xf32>
    %42 = vector.broadcast %41 : vector<1x256xf32> to vector<16x256xf32>
    %43 = arith.addf %40, %42 : vector<16x256xf32>
    %cst_29 = arith.constant dense<0xFF800000> : vector<16xf32>
    %44 = vector.multi_reduction <maximumf>, %43, %cst_29 [1] : vector<16x256xf32> to vector<16xf32>
    %45 = vector.shape_cast %44 : vector<16xf32> to vector<16x1xf32>
    %46 = vector.broadcast %45 : vector<16x1xf32> to vector<16x256xf32>
    %47 = arith.subf %43, %46 : vector<16x256xf32>
    %48 = math.exp %47 : vector<16x256xf32>
    %49 = arith.truncf %48 : vector<16x256xf32> to vector<16x256xbf16>
    %c0_30 = arith.constant 0 : index
    %c0_31 = arith.constant 0 : index
    %50 = vector.load %arg11[%c0_30, %c0_31] : memref<256x16xbf16, #tpu.memory_space<vmem>>, vector<256x16xbf16>
    %cst_32 = arith.constant dense<0.000000e+00> : vector<16x16xf32>
    %51 = tpu.matmul %49, %50, %cst_32 {dimension_numbers = #tpu.dot_dimension_numbers<[1], [0], [0], [1], [0, 0, 1, 1], [], []>} : vector<16x256xbf16>, vector<256x16xbf16>, vector<16x16xf32> -> vector<16x16xf32>
    %52 = arith.truncf %51 : vector<16x16xf32> to vector<16x16xbf16>
    %c0_33 = arith.constant 0 : index
    %c0_34 = arith.constant 0 : index
    %53 = vector.load %arg12[%c0_33, %c0_34] : memref<16x256xbf16, #tpu.memory_space<vmem>>, vector<16x256xbf16>
    %cst_35 = arith.constant dense<0.000000e+00> : vector<16x256xf32>
    %54 = tpu.matmul %52, %53, %cst_35 {dimension_numbers = #tpu.dot_dimension_numbers<[1], [0], [0], [1], [0, 0, 1, 1], [], []>} : vector<16x16xbf16>, vector<16x256xbf16>, vector<16x256xf32> -> vector<16x256xf32>
    %55 = tpu.reciprocal %54 {approx = true} : vector<16x256xf32> -> vector<16x256xf32>
    %56 = arith.mulf %48, %55 : vector<16x256xf32>
    %c0_36 = arith.constant 0 : index
    %c0_37 = arith.constant 0 : index
    %57 = vector.load %arg14[%c0_36, %c0_37] : memref<16x256xf32, #tpu.memory_space<vmem>>, vector<16x256xf32>
    tpu.vector_store %arg14[%c0_36, %c0_37], %56 {strides = array<i32>} : memref<16x256xf32, #tpu.memory_space<vmem>>, vector<16x256xf32>,
    return
  }
  func.func @transform_0(%arg0: i32) -> (i32, i32) {
    %c0_i32 = arith.constant 0 : i32
    %c0_i32_0 = arith.constant 0 : i32
    return %arg0, %c0_i32 : i32, i32
  }
  func.func @transform_1(%arg0: i32) -> (i32, i32) {
    %c0_i32 = arith.constant 0 : i32
    %c0_i32_0 = arith.constant 0 : i32
    return %arg0, %c0_i32 : i32, i32
  }
  func.func @transform_2(%arg0: i32) -> (i32, i32) {
    %c0_i32 = arith.constant 0 : i32
    %c0_i32_0 = arith.constant 0 : i32
    %c0_i32_1 = arith.constant 0 : i32
    return %c0_i32, %c0_i32_0 : i32, i32
  }
  func.func @transform_3(%arg0: i32) -> (i32, i32) {
    %c0_i32 = arith.constant 0 : i32
    %c0_i32_0 = arith.constant 0 : i32
    %c0_i32_1 = arith.constant 0 : i32
    return %c0_i32, %c0_i32_0 : i32, i32
  }
  func.func @transform_4(%arg0: i32) -> (i32, i32) {
    %c0_i32 = arith.constant 0 : i32
    %c0_i32_0 = arith.constant 0 : i32
    %c0_i32_1 = arith.constant 0 : i32
    return %c0_i32, %c0_i32_0 : i32, i32
  }
  func.func @transform_5(%arg0: i32) -> (i32, i32) {
    %c0_i32 = arith.constant 0 : i32
    %c0_i32_0 = arith.constant 0 : i32
    %c0_i32_1 = arith.constant 0 : i32
    return %c0_i32, %c0_i32_0 : i32, i32
  }
  func.func @transform_6(%arg0: i32) -> (i32, i32) {
    %c0_i32 = arith.constant 0 : i32
    %c0_i32_0 = arith.constant 0 : i32
    %c0_i32_1 = arith.constant 0 : i32
    return %c0_i32, %c0_i32_0 : i32, i32
  }
  func.func @transform_7(%arg0: i32) -> (i32, i32) {
    %c0_i32 = arith.constant 0 : i32
    %c0_i32_0 = arith.constant 0 : i32
    %c0_i32_1 = arith.constant 0 : i32
    return %c0_i32, %c0_i32_0 : i32, i32
  }
  func.func @transform_8(%arg0: i32) -> (i32, i32) {
    %c0_i32 = arith.constant 0 : i32
    %c0_i32_0 = arith.constant 0 : i32
    %c0_i32_1 = arith.constant 0 : i32
    return %c0_i32, %c0_i32_0 : i32, i32
  }
  func.func @transform_9(%arg0: i32) -> (i32, i32) {
    %c0_i32 = arith.constant 0 : i32
    %c0_i32_0 = arith.constant 0 : i32
    %c0_i32_1 = arith.constant 0 : i32
    return %c0_i32, %c0_i32_0 : i32, i32
  }
  func.func @transform_10(%arg0: i32) -> (i32, i32) {
    %c0_i32 = arith.constant 0 : i32
    %c0_i32_0 = arith.constant 0 : i32
    %c0_i32_1 = arith.constant 0 : i32
    return %c0_i32, %c0_i32_0 : i32, i32
  }
  func.func @transform_11(%arg0: i32) -> (i32, i32) {
    %c0_i32 = arith.constant 0 : i32
    %c0_i32_0 = arith.constant 0 : i32
    %c0_i32_1 = arith.constant 0 : i32
    return %c0_i32, %c0_i32_0 : i32, i32
  }
  func.func @transform_12(%arg0: i32) -> (i32, i32) {
    %c0_i32 = arith.constant 0 : i32
    %c0_i32_0 = arith.constant 0 : i32
    return %arg0, %c0_i32 : i32, i32
  }
  func.func @transform_13(%arg0: i32) -> (i32, i32) {
    %c0_i32 = arith.constant 0 : i32
    %c0_i32_0 = arith.constant 0 : i32
    return %arg0, %c0_i32 : i32, i32
  }
}

</mosaic_0001>

<llo_original>
// kernel: vae_forward.1
$region0: #{vae_forward.1}
  #allocation0 [shape = 'u32[]', space=smem, size = 0x4, offset = 0x4, fixed_abs, tag = 'smem constant byte address 0x4 - core index']
  #allocation1 [shape = 'u32[144,128]{1,0:T(1,128)}', space=vmem, size = 0x12000, scoped, tag = 'internal scratch']
  %s0 = inlined_call_operand.vmem [shape: f32[2,1024], index: 0, kind: input, shape index: {}]
  %s1 = inlined_call_operand.vmem [shape: f32[2,128], index: 1, kind: input, shape index: {}]
  %s2 = inlined_call_operand.hbm [shape: bf16[1024,128], index: 2, kind: input, shape index: {}]
  %s3 = inlined_call_operand.vmem [shape: f32[1,128], index: 3, kind: input, shape index: {}]
  %s4 = inlined_call_operand.vmem [shape: bf16[128,256], index: 4, kind: input, shape index: {}]
  %s5 = inlined_call_operand.vmem [shape: f32[1,256], index: 5, kind: input, shape index: {}]
  %s6 = inlined_call_operand.vmem [shape: bf16[128,128], index: 6, kind: input, shape index: {}]
  %s7 = inlined_call_operand.vmem [shape: f32[1,128], index: 7, kind: input, shape index: {}]
  %s8 = inlined_call_operand.vmem [shape: bf16[128,256], index: 8, kind: input, shape index: {}]
  %s9 = inlined_call_operand.vmem [shape: f32[1,256], index: 9, kind: input, shape index: {}]
  %s10 = inlined_call_operand.vmem [shape: bf16[256,16], index: 10, kind: input, shape index: {}]
  %s11 = inlined_call_operand.vmem [shape: bf16[16,256], index: 11, kind: input, shape index: {}]
  %s12 = inlined_call_operand.vmem [shape: f32[2,256], index: 12, kind: output, shape index: {0}]
  %s13 = inlined_call_operand.vmem [shape: f32[2,256], index: 13, kind: output, shape index: {1}]
  %14 = xla_tuple %s12, %s13
  %s15 = sld [smem:[#allocation0]]
  $region130: #{vae_forward.1} parent=0
    _
  %s17 = ssub.s32 1, %s15
  %s18 = scalar_select 0, %s17, %s15
  $region1: #{vae_forward.1} parent=0
    #allocation2 [shape = 'u8[262144]{0}', space=vmem, size = 0x40000, scoped, tag = 'input window, operand 2, single buffered']
    #allocation3 [shape = 's32[1]{0}', space=sflag, size = 0x4, scoped, tag = 'scoped memory for vae_forward.1']
    #allocation4 [shape = 'u8[16384]{0}', space=vmem, size = 0x4000, scoped, tag = 'output window, operand 0, single buffered']
    #allocation5 [shape = 'u8[16384]{0}', space=vmem, size = 0x4000, scoped, tag = 'output window, operand 1, single buffered']
    %19 = vsyncpa [#allocation3], 0
    // Predicated region
    $region2: #{vae_forward.1} parent=1 // pred_check
      _
    $region3: #{vae_forward.1} parent=1 // pred_check_branch
      %21 = sbr.rel (0) target = $region5
    $region4: #{vae_forward.1} parent=1 // pred_region
      _
    $region5: #{vae_forward.1} parent=1 // pred_fallthru
      _
    // Predicated region
    $region6: #{vae_forward.1} parent=1 // pred_check
      _
    $region7: #{vae_forward.1} parent=1 // pred_check_branch
      %23 = sbr.rel (0) target = $region9
    $region8: #{vae_forward.1} parent=1 // pred_region
      _
    $region9: #{vae_forward.1} parent=1 // pred_fallthru
      _
    // Predicated region
    $region10: #{vae_forward.1} parent=1 // pred_check
      _
    $region11: #{vae_forward.1} parent=1 // pred_check_branch
      %25 = sbr.rel (0) target = $region13
    $region12: #{vae_forward.1} parent=1 // pred_region
      %s27 = ssub.s32 8192, 8192
      %28 = vsyncadd [#allocation3], %s27
      %s29 = sshll.u32 [#allocation2], 4
      %s30 = int_to_ptr.vmem [resolvable:$true] %s29
      %35 = dma.hbm_to_vmem [thread:$0]  %s2, 8192, %s30, [#allocation3], 64, 64, 4
    $region13: #{vae_forward.1} parent=1 // pred_fallthru
      _
    // Predicated region
    $region14: #{vae_forward.1} parent=1 // pred_check
      _
    $region15: #{vae_forward.1} parent=1 // pred_check_branch
      %37 = sbr.rel (0) target = $region17
    $region16: #{vae_forward.1} parent=1 // pred_region
      _
    $region17: #{vae_forward.1} parent=1 // pred_fallthru
      _
    // Predicated region
    $region18: #{vae_forward.1} parent=1 // pred_check
      _
    $region19: #{vae_forward.1} parent=1 // pred_check_branch
      %39 = sbr.rel (0) target = $region21
    $region20: #{vae_forward.1} parent=1 // pred_region
      _
    $region21: #{vae_forward.1} parent=1 // pred_fallthru
      _
    // Predicated region
    $region22: #{vae_forward.1} parent=1 // pred_check
      _
    $region23: #{vae_forward.1} parent=1 // pred_check_branch
      %41 = sbr.rel (0) target = $region25
    $region24: #{vae_forward.1} parent=1 // pred_region
      _
    $region25: #{vae_forward.1} parent=1 // pred_fallthru
      _
    // Predicated region
    $region26: #{vae_forward.1} parent=1 // pred_check
      _
    $region27: #{vae_forward.1} parent=1 // pred_check_branch
      %43 = sbr.rel (0) target = $region29
    $region28: #{vae_forward.1} parent=1 // pred_region
      _
    $region29: #{vae_forward.1} parent=1 // pred_fallthru
      _
    // Predicated region
    $region30: #{vae_forward.1} parent=1 // pred_check
      _
    $region31: #{vae_forward.1} parent=1 // pred_check_branch
      %45 = sbr.rel (0) target = $region33
    $region32: #{vae_forward.1} parent=1 // pred_region
      _
    $region33: #{vae_forward.1} parent=1 // pred_fallthru
      _
    // Predicated region
    $region34: #{vae_forward.1} parent=1 // pred_check
      _
    $region35: #{vae_forward.1} parent=1 // pred_check_branch
      %47 = sbr.rel (0) target = $region37
    $region36: #{vae_forward.1} parent=1 // pred_region
      _
    $region37: #{vae_forward.1} parent=1 // pred_fallthru
      _
    // Predicated region
    $region38: #{vae_forward.1} parent=1 // pred_check
      _
    $region39: #{vae_forward.1} parent=1 // pred_check_branch
      %49 = sbr.rel (0) target = $region41
    $region40: #{vae_forward.1} parent=1 // pred_region
      _
    $region41: #{vae_forward.1} parent=1 // pred_fallthru
      _
    // Predicated region
    $region42: #{vae_forward.1} parent=1 // pred_check
      _
    $region43: #{vae_forward.1} parent=1 // pred_check_branch
      %51 = sbr.rel (0) target = $region45
    $region44: #{vae_forward.1} parent=1 // pred_region
      _
    $region45: #{vae_forward.1} parent=1 // pred_fallthru
      _
    // Predicated region
    $region46: #{vae_forward.1} parent=1 // pred_check
      _
    $region47: #{vae_forward.1} parent=1 // pred_check_branch
      %53 = sbr.rel (0) target = $region49
    $region48: #{vae_forward.1} parent=1 // pred_region
      _
    $region49: #{vae_forward.1} parent=1 // pred_fallthru
      _
    // Predicated region
    $region50: #{vae_forward.1} parent=1 // pred_check
      _
    $region51: #{vae_forward.1} parent=1 // pred_check_branch
      %55 = sbr.rel (0) target = $region53
    $region52: #{vae_forward.1} parent=1 // pred_region
      %56 = dma.done [#allocation3], 8192
    $region53: #{vae_forward.1} parent=1 // pred_fallthru
      _
    %v58 = vld [vmem:[%s0] sm:$0xff]
    %v59 = vld [vmem:[%s0 + $0x8] sm:$0xff]
    %v60 = vld [vmem:[%s0 + $0x10] sm:$0xff]
    %v61 = vld [vmem:[%s0 + $0x18] sm:$0xff]
    %v62 = vld [vmem:[%s0 + $0x20] sm:$0xff]
    %v63 = vld [vmem:[%s0 + $0x28] sm:$0xff]
    %v64 = vld [vmem:[%s0 + $0x30] sm:$0xff]
    %v65 = vld [vmem:[%s0 + $0x38] sm:$0xff]
    %v66 = vld [vmem:[%s0 + $0x40] sm:$0xff]
    %v67 = vld [vmem:[%s0 + $0x48] sm:$0xff]
    %v68 = vld [vmem:[%s0 + $0x50] sm:$0xff]
    %v69 = vld [vmem:[%s0 + $0x58] sm:$0xff]
    %v70 = vld [vmem:[%s0 + $0x60] sm:$0xff]
    %v71 = vld [vmem:[%s0 + $0x68] sm:$0xff]
    %v72 = vld [vmem:[%s0 + $0x70] sm:$0xff]
    %v73 = vld [vmem:[%s0 + $0x78] sm:$0xff]
    %v90 = vcombine.low %v58, %v60
    %v91 = vcombine.high %v58, %v60
    %v92 = vcombine.low %v62, %v64
    %v93 = vcombine.high %v62, %v64
    %v95 = vunpack.c.l.s4 1983009808
    %v96 = vunpack.c.0.s8 %v95
    %v97 = vlaneseq
    %v98 = vshrl.u32 %v97, 7
    %v99 = vsub.s32 %v96, %v98
    %v100 = vrot.slane %v90, %v99
    %v102 = vunpack.c.l.s4 1983009808
    %v103 = vunpack.c.0.s8 %v102
    %v104 = vlaneseq
    %v105 = vshrl.u32 %v104, 7
    %v106 = vsub.s32 %v103, %v105
    %v107 = vrot.slane %v91, %v106
    %v109 = vunpack.c.l.s4 1983009808
    %v110 = vunpack.c.0.s8 %v109
    %v111 = vlaneseq
    %v112 = vshrl.u32 %v111, 7
    %v113 = vsub.s32 %v110, %v112
    %v114 = vrot.slane %v92, %v113
    %v116 = vunpack.c.l.s4 1983009808
    %v117 = vunpack.c.0.s8 %v116
    %v118 = vlaneseq
    %v119 = vshrl.u32 %v118, 7
    %v120 = vsub.s32 %v117, %v119
    %v121 = vrot.slane %v93, %v120
    %v122 = vcombine.low %v100, %v114
    %v123 = vcombine.high %v100, %v114
    %v124 = vcombine.low %v107, %v121
    %v125 = vcombine.high %v107, %v121
    %v126 = vcombine.low %v59, %v61
    %v127 = vcombine.high %v59, %v61
    %v128 = vcombine.low %v63, %v65
    %v129 = vcombine.high %v63, %v65
    %v131 = vunpack.c.l.s4 1983009808
    %v132 = vunpack.c.0.s8 %v131
    %v133 = vlaneseq
    %v134 = vshrl.u32 %v133, 7
    %v135 = vsub.s32 %v132, %v134
    %v136 = vrot.slane %v126, %v135
    %v138 = vunpack.c.l.s4 1983009808
    %v139 = vunpack.c.0.s8 %v138
    %v140 = vlaneseq
    %v141 = vshrl.u32 %v140, 7
    %v142 = vsub.s32 %v139, %v141
    %v143 = vrot.slane %v127, %v142
    %v145 = vunpack.c.l.s4 1983009808
    %v146 = vunpack.c.0.s8 %v145
    %v147 = vlaneseq
    %v148 = vshrl.u32 %v147, 7
    %v149 = vsub.s32 %v146, %v148
    %v150 = vrot.slane %v128, %v149
    %v152 = vunpack.c.l.s4 1983009808
    %v153 = vunpack.c.0.s8 %v152
    %v154 = vlaneseq
    %v155 = vshrl.u32 %v154, 7
    %v156 = vsub.s32 %v153, %v155
    %v157 = vrot.slane %v129, %v156
    %v158 = vcombine.low %v136, %v150
    %v159 = vcombine.high %v136, %v150
    %v160 = vcombine.low %v143, %v157
    %v161 = vcombine.high %v143, %v157
    %v162 = vcombine.low %v66, %v68
    %v163 = vcombine.high %v66, %v68
    %v164 = vcombine.low %v70, %v72
    %v165 = vcombine.high %v70, %v72
    %v167 = vunpack.c.l.s4 1983009808
    %v168 = vunpack.c.0.s8 %v167
    %v169 = vlaneseq
    %v170 = vshrl.u32 %v169, 7
    %v171 = vsub.s32 %v168, %v170
    %v172 = vrot.slane %v162, %v171
    %v174 = vunpack.c.l.s4 1983009808
    %v175 = vunpack.c.0.s8 %v174
    %v176 = vlaneseq
    %v177 = vshrl.u32 %v176, 7
    %v178 = vsub.s32 %v175, %v177
    %v179 = vrot.slane %v163, %v178
    %v181 = vunpack.c.l.s4 1983009808
    %v182 = vunpack.c.0.s8 %v181
    %v183 = vlaneseq
    %v184 = vshrl.u32 %v183, 7
    %v185 = vsub.s32 %v182, %v184
    %v186 = vrot.slane %v164, %v185
    %v188 = vunpack.c.l.s4 1983009808
    %v189 = vunpack.c.0.s8 %v188
    %v190 = vlaneseq
    %v191 = vshrl.u32 %v190, 7
    %v192 = vsub.s32 %v189, %v191
    %v193 = vrot.slane %v165, %v192
    %v194 = vcombine.low %v172, %v186
    %v195 = vcombine.high %v172, %v186
    %v196 = vcombine.low %v179, %v193
    %v197 = vcombine.high %v179, %v193
    %v198 = vcombine.low %v67, %v69
    %v199 = vcombine.high %v67, %v69
    %v200 = vcombine.low %v71, %v73
    %v201 = vcombine.high %v71, %v73
    %v203 = vunpack.c.l.s4 1983009808
    %v204 = vunpack.c.0.s8 %v203
    %v205 = vlaneseq
    %v206 = vshrl.u32 %v205, 7
    %v207 = vsub.s32 %v204, %v206
    %v208 = vrot.slane %v198, %v207
    %v210 = vunpack.c.l.s4 1983009808
    %v211 = vunpack.c.0.s8 %v210
    %v212 = vlaneseq
    %v213 = vshrl.u32 %v212, 7
    %v214 = vsub.s32 %v211, %v213
    %v215 = vrot.slane %v199, %v214
    %v217 = vunpack.c.l.s4 1983009808
    %v218 = vunpack.c.0.s8 %v217
    %v219 = vlaneseq
    %v220 = vshrl.u32 %v219, 7
    %v221 = vsub.s32 %v218, %v220
    %v222 = vrot.slane %v200, %v221
    %v224 = vunpack.c.l.s4 1983009808
    %v225 = vunpack.c.0.s8 %v224
    %v226 = vlaneseq
    %v227 = vshrl.u32 %v226, 7
    %v228 = vsub.s32 %v225, %v227
    %v229 = vrot.slane %v201, %v228
    %v230 = vcombine.low %v208, %v222
    %v231 = vcombine.high %v208, %v222
    %v232 = vcombine.low %v215, %v229
    %v233 = vcombine.high %v215, %v229
    %v250 = vpack.c.bf16 %v194, %v122
    %v251 = vpack.c.bf16 %v195, %v123
    %v252 = vpack.c.bf16 %v196, %v124
    %v253 = vpack.c.bf16 %v197, %v125
    %v254 = vpack.c.bf16 %v230, %v158
    %v255 = vpack.c.bf16 %v231, %v159
    %v256 = vpack.c.bf16 %v232, %v160
    %v257 = vpack.c.bf16 %v233, %v161
    %v258 = vld [vmem:[#allocation2] sm:$0xf]
    %v259 = vld [vmem:[#allocation2 + $0x4] sm:$0xf]
    %v260 = vld [vmem:[#allocation2 + $0x8] sm:$0xf]
    %v261 = vld [vmem:[#allocation2 + $0xc] sm:$0xf]
    %v262 = vld [vmem:[#allocation2 + $0x10] sm:$0xf]
    %v263 = vld [vmem:[#allocation2 + $0x14] sm:$0xf]
    %v264 = vld [vmem:[#allocation2 + $0x18] sm:$0xf]
    %v265 = vld [vmem:[#allocation2 + $0x1c] sm:$0xf]
    %v266 = vld [vmem:[#allocation2 + $0x20] sm:$0xf]
    %v267 = vld [vmem:[#allocation2 + $0x24] sm:$0xf]
    %v268 = vld [vmem:[#allocation2 + $0x28] sm:$0xf]
    %v269 = vld [vmem:[#allocation2 + $0x2c] sm:$0xf]
    %v270 = vld [vmem:[#allocation2 + $0x30] sm:$0xf]
    %v271 = vld [vmem:[#allocation2 + $0x34] sm:$0xf]
    %v272 = vld [vmem:[#allocation2 + $0x38] sm:$0xf]
    %v273 = vld [vmem:[#allocation2 + $0x3c] sm:$0xf]
    %v274 = vld [vmem:[#allocation2 + $0x40] sm:$0xf]
    %v275 = vld [vmem:[#allocation2 + $0x44] sm:$0xf]
    %v276 = vld [vmem:[#allocation2 + $0x48] sm:$0xf]
    %v277 = vld [vmem:[#allocation2 + $0x4c] sm:$0xf]
    %v278 = vld [vmem:[#allocation2 + $0x50] sm:$0xf]
    %v279 = vld [vmem:[#allocation2 + $0x54] sm:$0xf]
    %v280 = vld [vmem:[#allocation2 + $0x58] sm:$0xf]
    %v281 = vld [vmem:[#allocation2 + $0x5c] sm:$0xf]
    %v282 = vld [vmem:[#allocation2 + $0x60] sm:$0xf]
    %v283 = vld [vmem:[#allocation2 + $0x64] sm:$0xf]
    %v284 = vld [vmem:[#allocation2 + $0x68] sm:$0xf]
    %v285 = vld [vmem:[#allocation2 + $0x6c] sm:$0xf]
    %v286 = vld [vmem:[#allocation2 + $0x70] sm:$0xf]
    %v287 = vld [vmem:[#allocation2 + $0x74] sm:$0xf]
    %v288 = vld [vmem:[#allocation2 + $0x78] sm:$0xf]
    %v289 = vld [vmem:[#allocation2 + $0x7c] sm:$0xf]
    %v290 = vld [vmem:[#allocation2 + $0x80] sm:$0xf]
    %v291 = vld [vmem:[#allocation2 + $0x84] sm:$0xf]
    %v292 = vld [vmem:[#allocation2 + $0x88] sm:$0xf]
    %v293 = vld [vmem:[#allocation2 + $0x8c] sm:$0xf]
    %v294 = vld [vmem:[#allocation2 + $0x90] sm:$0xf]
    %v295 = vld [vmem:[#allocation2 + $0x94] sm:$0xf]
    %v296 = vld [vmem:[#allocation2 + $0x98] sm:$0xf]
    %v297 = vld [vmem:[#allocation2 + $0x9c] sm:$0xf]
    %v298 = vld [vmem:[#allocation2 + $0xa0] sm:$0xf]
    %v299 = vld [vmem:[#allocation2 + $0xa4] sm:$0xf]
    %v300 = vld [vmem:[#allocation2 + $0xa8] sm:$0xf]
    %v301 = vld [vmem:[#allocation2 + $0xac] sm:$0xf]
    %v302 = vld [vmem:[#allocation2 + $0xb0] sm:$0xf]
    %v303 = vld [vmem:[#allocation2 + $0xb4] sm:$0xf]
    %v304 = vld [vmem:[#allocation2 + $0xb8] sm:$0xf]
    %v305 = vld [vmem:[#allocation2 + $0xbc] sm:$0xf]
    %v306 = vld [vmem:[#allocation2 + $0xc0] sm:$0xf]
    %v307 = vld [vmem:[#allocation2 + $0xc4] sm:$0xf]
    %v308 = vld [vmem:[#allocation2 + $0xc8] sm:$0xf]
    %v309 = vld [vmem:[#allocation2 + $0xcc] sm:$0xf]
    %v310 = vld [vmem:[#allocation2 + $0xd0] sm:$0xf]
    %v311 = vld [vmem:[#allocation2 + $0xd4] sm:$0xf]
    %v312 = vld [vmem:[#allocation2 + $0xd8] sm:$0xf]
    %v313 = vld [vmem:[#allocation2 + $0xdc] sm:$0xf]
    %v314 = vld [vmem:[#allocation2 + $0xe0] sm:$0xf]
    %v315 = vld [vmem:[#allocation2 + $0xe4] sm:$0xf]
    %v316 = vld [vmem:[#allocation2 + $0xe8] sm:$0xf]
    %v317 = vld [vmem:[#allocation2 + $0xec] sm:$0xf]
    %v318 = vld [vmem:[#allocation2 + $0xf0] sm:$0xf]
    %v319 = vld [vmem:[#allocation2 + $0xf4] sm:$0xf]
    %v320 = vld [vmem:[#allocation2 + $0xf8] sm:$0xf]
    %v321 = vld [vmem:[#allocation2 + $0xfc] sm:$0xf]
    %v322 = vld [vmem:[#allocation2 + $0x100] sm:$0xf]
    %v323 = vld [vmem:[#allocation2 + $0x104] sm:$0xf]
    %v324 = vld [vmem:[#allocation2 + $0x108] sm:$0xf]
    %v325 = vld [vmem:[#allocation2 + $0x10c] sm:$0xf]
    %v326 = vld [vmem:[#allocation2 + $0x110] sm:$0xf]
    %v327 = vld [vmem:[#allocation2 + $0x114] sm:$0xf]
    %v328 = vld [vmem:[#allocation2 + $0x118] sm:$0xf]
    %v329 = vld [vmem:[#allocation2 + $0x11c] sm:$0xf]
    %v330 = vld [vmem:[#allocation2 + $0x120] sm:$0xf]
    %v331 = vld [vmem:[#allocation2 + $0x124] sm:$0xf]
    %v332 = vld [vmem:[#allocation2 + $0x128] sm:$0xf]
    %v333 = vld [vmem:[#allocation2 + $0x12c] sm:$0xf]
    %v334 = vld [vmem:[#allocation2 + $0x130] sm:$0xf]
    %v335 = vld [vmem:[#allocation2 + $0x134] sm:$0xf]
    %v336 = vld [vmem:[#allocation2 + $0x138] sm:$0xf]
    %v337 = vld [vmem:[#allocation2 + $0x13c] sm:$0xf]
    %v338 = vld [vmem:[#allocation2 + $0x140] sm:$0xf]
    %v339 = vld [vmem:[#allocation2 + $0x144] sm:$0xf]
    %v340 = vld [vmem:[#allocation2 + $0x148] sm:$0xf]
    %v341 = vld [vmem:[#allocation2 + $0x14c] sm:$0xf]
    %v342 = vld [vmem:[#allocation2 + $0x150] sm:$0xf]
    %v343 = vld [vmem:[#allocation2 + $0x154] sm:$0xf]
    %v344 = vld [vmem:[#allocation2 + $0x158] sm:$0xf]
    %v345 = vld [vmem:[#allocation2 + $0x15c] sm:$0xf]
    %v346 = vld [vmem:[#allocation2 + $0x160] sm:$0xf]
    %v347 = vld [vmem:[#allocation2 + $0x164] sm:$0xf]
    %v348 = vld [vmem:[#allocation2 + $0x168] sm:$0xf]
    %v349 = vld [vmem:[#allocation2 + $0x16c] sm:$0xf]
    %v350 = vld [vmem:[#allocation2 + $0x170] sm:$0xf]
    %v351 = vld [vmem:[#allocation2 + $0x174] sm:$0xf]
    %v352 = vld [vmem:[#allocation2 + $0x178] sm:$0xf]
    %v353 = vld [vmem:[#allocation2 + $0x17c] sm:$0xf]
    %v354 = vld [vmem:[#allocation2 + $0x180] sm:$0xf]
    %v355 = vld [vmem:[#allocation2 + $0x184] sm:$0xf]
    %v356 = vld [vmem:[#allocation2 + $0x188] sm:$0xf]
    %v357 = vld [vmem:[#allocation2 + $0x18c] sm:$0xf]
    %v358 = vld [vmem:[#allocation2 + $0x190] sm:$0xf]
    %v359 = vld [vmem:[#allocation2 + $0x194] sm:$0xf]
    %v360 = vld [vmem:[#allocation2 + $0x198] sm:$0xf]
    %v361 = vld [vmem:[#allocation2 + $0x19c] sm:$0xf]
    %v362 = vld [vmem:[#allocation2 + $0x1a0] sm:$0xf]
    %v363 = vld [vmem:[#allocation2 + $0x1a4] sm:$0xf]
    %v364 = vld [vmem:[#allocation2 + $0x1a8] sm:$0xf]
    %v365 = vld [vmem:[#allocation2 + $0x1ac] sm:$0xf]
    %v366 = vld [vmem:[#allocation2 + $0x1b0] sm:$0xf]
    %v367 = vld [vmem:[#allocation2 + $0x1b4] sm:$0xf]
    %v368 = vld [vmem:[#allocation2 + $0x1b8] sm:$0xf]
    %v369 = vld [vmem:[#allocation2 + $0x1bc] sm:$0xf]
    %v370 = vld [vmem:[#allocation2 + $0x1c0] sm:$0xf]
    %v371 = vld [vmem:[#allocation2 + $0x1c4] sm:$0xf]
    %v372 = vld [vmem:[#allocation2 + $0x1c8] sm:$0xf]
    %v373 = vld [vmem:[#allocation2 + $0x1cc] sm:$0xf]
    %v374 = vld [vmem:[#allocation2 + $0x1d0] sm:$0xf]
    %v375 = vld [vmem:[#allocation2 + $0x1d4] sm:$0xf]
    %v376 = vld [vmem:[#allocation2 + $0x1d8] sm:$0xf]
    %v377 = vld [vmem:[#allocation2 + $0x1dc] sm:$0xf]
    %v378 = vld [vmem:[#allocation2 + $0x1e0] sm:$0xf]
    %v379 = vld [vmem:[#allocation2 + $0x1e4] sm:$0xf]
    %v380 = vld [vmem:[#allocation2 + $0x1e8] sm:$0xf]
    %v381 = vld [vmem:[#allocation2 + $0x1ec] sm:$0xf]
    %v382 = vld [vmem:[#allocation2 + $0x1f0] sm:$0xf]
    %v383 = vld [vmem:[#allocation2 + $0x1f4] sm:$0xf]
    %v384 = vld [vmem:[#allocation2 + $0x1f8] sm:$0xf]
    %v385 = vld [vmem:[#allocation2 + $0x1fc] sm:$0xf]
    %v386 = vld [vmem:[%s3] sm:$0x1]
    %v388 = vlaneseq
    %v389 = vshrl.u32 %v388, 7
    %v390 = vsub.s32 0, %v389
    %v391 = vrot.slane %v386, %v390
    %v521 = vunpack.c.l.b16 %v258
    %v522 = vunpack.c.l.b16 %v259
    %v523 = vunpack.c.l.b16 %v260
    %v524 = vunpack.c.l.b16 %v261
    %v525 = vunpack.c.l.b16 %v262
    %v526 = vunpack.c.l.b16 %v263
    %v527 = vunpack.c.l.b16 %v264
    %v528 = vunpack.c.l.b16 %v265
    %v529 = vunpack.c.l.b16 %v266
    %v530 = vunpack.c.l.b16 %v267
    %v531 = vunpack.c.l.b16 %v268
    %v532 = vunpack.c.l.b16 %v269
    %v533 = vunpack.c.l.b16 %v270
    %v534 = vunpack.c.l.b16 %v271
    %v535 = vunpack.c.l.b16 %v272
    %v536 = vunpack.c.l.b16 %v273
    %v537 = vunpack.c.l.b16 %v274
    %v538 = vunpack.c.l.b16 %v275
    %v539 = vunpack.c.l.b16 %v276
    %v540 = vunpack.c.l.b16 %v277
    %v541 = vunpack.c.l.b16 %v278
    %v542 = vunpack.c.l.b16 %v279
    %v543 = vunpack.c.l.b16 %v280
    %v544 = vunpack.c.l.b16 %v281
    %v545 = vunpack.c.l.b16 %v282
    %v546 = vunpack.c.l.b16 %v283
    %v547 = vunpack.c.l.b16 %v284
    %v548 = vunpack.c.l.b16 %v285
    %v549 = vunpack.c.l.b16 %v286
    %v550 = vunpack.c.l.b16 %v287
    %v551 = vunpack.c.l.b16 %v288
    %v552 = vunpack.c.l.b16 %v289
    %v553 = vunpack.c.l.b16 %v290
    %v554 = vunpack.c.l.b16 %v291
    %v555 = vunpack.c.l.b16 %v292
    %v556 = vunpack.c.l.b16 %v293
    %v557 = vunpack.c.l.b16 %v294
    %v558 = vunpack.c.l.b16 %v295
    %v559 = vunpack.c.l.b16 %v296
    %v560 = vunpack.c.l.b16 %v297
    %v561 = vunpack.c.l.b16 %v298
    %v562 = vunpack.c.l.b16 %v299
    %v563 = vunpack.c.l.b16 %v300
    %v564 = vunpack.c.l.b16 %v301
    %v565 = vunpack.c.l.b16 %v302
    %v566 = vunpack.c.l.b16 %v303
    %v567 = vunpack.c.l.b16 %v304
    %v568 = vunpack.c.l.b16 %v305
    %v569 = vunpack.c.l.b16 %v306
    %v570 = vunpack.c.l.b16 %v307
    %v571 = vunpack.c.l.b16 %v308
    %v572 = vunpack.c.l.b16 %v309
    %v573 = vunpack.c.l.b16 %v310
    %v574 = vunpack.c.l.b16 %v311
    %v575 = vunpack.c.l.b16 %v312
    %v576 = vunpack.c.l.b16 %v313
    %v577 = vunpack.c.l.b16 %v314
    %v578 = vunpack.c.l.b16 %v315
    %v579 = vunpack.c.l.b16 %v316
    %v580 = vunpack.c.l.b16 %v317
    %v581 = vunpack.c.l.b16 %v318
    %v582 = vunpack.c.l.b16 %v319
    %v583 = vunpack.c.l.b16 %v320
    %v584 = vunpack.c.l.b16 %v321
    %v585 = vunpack.c.l.b16 %v322
    %v586 = vunpack.c.l.b16 %v323
    %v587 = vunpack.c.l.b16 %v324
    %v588 = vunpack.c.l.b16 %v325
    %v589 = vunpack.c.l.b16 %v326
    %v590 = vunpack.c.l.b16 %v327
    %v591 = vunpack.c.l.b16 %v328
    %v592 = vunpack.c.l.b16 %v329
    %v593 = vunpack.c.l.b16 %v330
    %v594 = vunpack.c.l.b16 %v331
    %v595 = vunpack.c.l.b16 %v332
    %v596 = vunpack.c.l.b16 %v333
    %v597 = vunpack.c.l.b16 %v334
    %v598 = vunpack.c.l.b16 %v335
    %v599 = vunpack.c.l.b16 %v336
    %v600 = vunpack.c.l.b16 %v337
    %v601 = vunpack.c.l.b16 %v338
    %v602 = vunpack.c.l.b16 %v339
    %v603 = vunpack.c.l.b16 %v340
    %v604 = vunpack.c.l.b16 %v341
    %v605 = vunpack.c.l.b16 %v342
    %v606 = vunpack.c.l.b16 %v343
    %v607 = vunpack.c.l.b16 %v344
    %v608 = vunpack.c.l.b16 %v345
    %v609 = vunpack.c.l.b16 %v346
    %v610 = vunpack.c.l.b16 %v347
    %v611 = vunpack.c.l.b16 %v348
    %v612 = vunpack.c.l.b16 %v349
    %v613 = vunpack.c.l.b16 %v350
    %v614 = vunpack.c.l.b16 %v351
    %v615 = vunpack.c.l.b16 %v352
    %v616 = vunpack.c.l.b16 %v353
    %v617 = vunpack.c.l.b16 %v354
    %v618 = vunpack.c.l.b16 %v355
    %v619 = vunpack.c.l.b16 %v356
    %v620 = vunpack.c.l.b16 %v357
    %v621 = vunpack.c.l.b16 %v358
    %v622 = vunpack.c.l.b16 %v359
    %v623 = vunpack.c.l.b16 %v360
    %v624 = vunpack.c.l.b16 %v361
    %v625 = vunpack.c.l.b16 %v362
    %v626 = vunpack.c.l.b16 %v363
    %v627 = vunpack.c.l.b16 %v364
    %v628 = vunpack.c.l.b16 %v365
    %v629 = vunpack.c.l.b16 %v366
    %v630 = vunpack.c.l.b16 %v367
    %v631 = vunpack.c.l.b16 %v368
    %v632 = vunpack.c.l.b16 %v369
    %v633 = vunpack.c.l.b16 %v370
    %v634 = vunpack.c.l.b16 %v371
    %v635 = vunpack.c.l.b16 %v372
    %v636 = vunpack.c.l.b16 %v373
    %v637 = vunpack.c.l.b16 %v374
    %v638 = vunpack.c.l.b16 %v375
    %v639 = vunpack.c.l.b16 %v376
    %v640 = vunpack.c.l.b16 %v377
    %v641 = vunpack.c.l.b16 %v378
    %v642 = vunpack.c.l.b16 %v379
    %v643 = vunpack.c.l.b16 %v380
    %v644 = vunpack.c.l.b16 %v381
    %v645 = vunpack.c.l.b16 %v382
    %v646 = vunpack.c.l.b16 %v383
    %v647 = vunpack.c.l.b16 %v384
    %v648 = vunpack.c.l.b16 %v385
    %v649 = vpack.c.b16 %v522, %v521
    %v650 = vpack.c.b16 %v524, %v523
    %v651 = vpack.c.b16 %v526, %v525
    %v652 = vpack.c.b16 %v528, %v527
    %v653 = vpack.c.b16 %v530, %v529
    %v654 = vpack.c.b16 %v532, %v531
    %v655 = vpack.c.b16 %v534, %v533
    %v656 = vpack.c.b16 %v536, %v535
    %v657 = vpack.c.b16 %v538, %v537
    %v658 = vpack.c.b16 %v540, %v539
    %v659 = vpack.c.b16 %v542, %v541
    %v660 = vpack.c.b16 %v544, %v543
    %v661 = vpack.c.b16 %v546, %v545
    %v662 = vpack.c.b16 %v548, %v547
    %v663 = vpack.c.b16 %v550, %v549
    %v664 = vpack.c.b16 %v552, %v551
    %v665 = vpack.c.b16 %v554, %v553
    %v666 = vpack.c.b16 %v556, %v555
    %v667 = vpack.c.b16 %v558, %v557
    %v668 = vpack.c.b16 %v560, %v559
    %v669 = vpack.c.b16 %v562, %v561
    %v670 = vpack.c.b16 %v564, %v563
    %v671 = vpack.c.b16 %v566, %v565
    %v672 = vpack.c.b16 %v568, %v567
    %v673 = vpack.c.b16 %v570, %v569
    %v674 = vpack.c.b16 %v572, %v571
    %v675 = vpack.c.b16 %v574, %v573
    %v676 = vpack.c.b16 %v576, %v575
    %v677 = vpack.c.b16 %v578, %v577
    %v678 = vpack.c.b16 %v580, %v579
    %v679 = vpack.c.b16 %v582, %v581
    %v680 = vpack.c.b16 %v584, %v583
    %v681 = vpack.c.b16 %v586, %v585
    %v682 = vpack.c.b16 %v588, %v587
    %v683 = vpack.c.b16 %v590, %v589
    %v684 = vpack.c.b16 %v592, %v591
    %v685 = vpack.c.b16 %v594, %v593
    %v686 = vpack.c.b16 %v596, %v595
    %v687 = vpack.c.b16 %v598, %v597
    %v688 = vpack.c.b16 %v600, %v599
    %v689 = vpack.c.b16 %v602, %v601
    %v690 = vpack.c.b16 %v604, %v603
    %v691 = vpack.c.b16 %v606, %v605
    %v692 = vpack.c.b16 %v608, %v607
    %v693 = vpack.c.b16 %v610, %v609
    %v694 = vpack.c.b16 %v612, %v611
    %v695 = vpack.c.b16 %v614, %v613
    %v696 = vpack.c.b16 %v616, %v615
    %v697 = vpack.c.b16 %v618, %v617
    %v698 = vpack.c.b16 %v620, %v619
    %v699 = vpack.c.b16 %v622, %v621
    %v700 = vpack.c.b16 %v624, %v623
    %v701 = vpack.c.b16 %v626, %v625
    %v702 = vpack.c.b16 %v628, %v627
    %v703 = vpack.c.b16 %v630, %v629
    %v704 = vpack.c.b16 %v632, %v631
    %v705 = vpack.c.b16 %v634, %v633
    %v706 = vpack.c.b16 %v636, %v635
    %v707 = vpack.c.b16 %v638, %v637
    %v708 = vpack.c.b16 %v640, %v639
    %v709 = vpack.c.b16 %v642, %v641
    %v710 = vpack.c.b16 %v644, %v643
    %v711 = vpack.c.b16 %v646, %v645
    %v712 = vpack.c.b16 %v648, %v647
    %777 = vmatprep.subr.bf16.mxu0 0
    %778 = vmatpush1.bf16.msra.mxu0 %v649
    %779 = vmatprep.subr.bf16.mxu0 0
    %780 = vmatpush1.bf16.msra.mxu0 %v650
    %781 = vmatprep.subr.bf16.mxu0 0
    %782 = vmatpush1.bf16.msra.mxu0 %v651
    %783 = vmatprep.subr.bf16.mxu0 0
    %784 = vmatpush1.bf16.msra.mxu0 %v652
    %785 = vmatprep.subr.bf16.mxu0 0
    %786 = vmatpush1.bf16.msra.mxu0 %v653
    %787 = vmatprep.subr.bf16.mxu0 0
    %788 = vmatpush1.bf16.msra.mxu0 %v654
    %789 = vmatprep.subr.bf16.mxu0 0
    %790 = vmatpush1.bf16.msra.mxu0 %v655
    %791 = vmatprep.subr.bf16.mxu0 0
    %792 = vmatpush1.bf16.msra.mxu0 %v656
    %793 = vmatprep.subr.bf16.mxu0 0
    %794 = vmatpush1.bf16.msra.mxu0 %v657
    %795 = vmatprep.subr.bf16.mxu0 0
    %796 = vmatpush1.bf16.msra.mxu0 %v658
    %797 = vmatprep.subr.bf16.mxu0 0
    %798 = vmatpush1.bf16.msra.mxu0 %v659
    %799 = vmatprep.subr.bf16.mxu0 0
    %800 = vmatpush1.bf16.msra.mxu0 %v660
    %801 = vmatprep.subr.bf16.mxu0 0
    %802 = vmatpush1.bf16.msra.mxu0 %v661
    %803 = vmatprep.subr.bf16.mxu0 0
    %804 = vmatpush1.bf16.msra.mxu0 %v662
    %805 = vmatprep.subr.bf16.mxu0 0
    %806 = vmatpush1.bf16.msra.mxu0 %v663
    %807 = vmatprep.subr.bf16.mxu0 0
    %808 = vmatpush1.bf16.msra.mxu0 %v664
    %809 = vmatprep.mubr.bf16.mxu0 %v251
    %810 = vmatmul.mubr.bf16.gmra.mrb[0].mxu0 %v250
    %v811 = vpop.f32.mrb[0].mxu0
    %v812 = vadd.f32 %v391, %v811
    %v813 = vpop.f32.mrb[0].mxu0
    %v814 = vpop.f32.mrb[0].mxu0
    %v815 = vadd.f32 %v391, %v814
    %v816 = vpop.f32.mrb[0].mxu0
    %817 = vdwg.mxu0
    %818 = vmatprep.subr.bf16.mxu0 0
    %819 = vmatpush1.bf16.msra.mxu0 %v665
    %820 = vmatprep.subr.bf16.mxu0 0
    %821 = vmatpush1.bf16.msra.mxu0 %v666
    %822 = vmatprep.subr.bf16.mxu0 0
    %823 = vmatpush1.bf16.msra.mxu0 %v667
    %824 = vmatprep.subr.bf16.mxu0 0
    %825 = vmatpush1.bf16.msra.mxu0 %v668
    %826 = vmatprep.subr.bf16.mxu0 0
    %827 = vmatpush1.bf16.msra.mxu0 %v669
    %828 = vmatprep.subr.bf16.mxu0 0
    %829 = vmatpush1.bf16.msra.mxu0 %v670
    %830 = vmatprep.subr.bf16.mxu0 0
    %831 = vmatpush1.bf16.msra.mxu0 %v671
    %832 = vmatprep.subr.bf16.mxu0 0
    %833 = vmatpush1.bf16.msra.mxu0 %v672
    %834 = vmatprep.subr.bf16.mxu0 0
    %835 = vmatpush1.bf16.msra.mxu0 %v673
    %836 = vmatprep.subr.bf16.mxu0 0
    %837 = vmatpush1.bf16.msra.mxu0 %v674
    %838 = vmatprep.subr.bf16.mxu0 0
    %839 = vmatpush1.bf16.msra.mxu0 %v675
    %840 = vmatprep.subr.bf16.mxu0 0
    %841 = vmatpush1.bf16.msra.mxu0 %v676
    %842 = vmatprep.subr.bf16.mxu0 0
    %843 = vmatpush1.bf16.msra.mxu0 %v677
    %844 = vmatprep.subr.bf16.mxu0 0
    %845 = vmatpush1.bf16.msra.mxu0 %v678
    %846 = vmatprep.subr.bf16.mxu0 0
    %847 = vmatpush1.bf16.msra.mxu0 %v679
    %848 = vmatprep.subr.bf16.mxu0 0
    %849 = vmatpush1.bf16.msra.mxu0 %v680
    %850 = vmatprep.mubr.bf16.mxu0 %v253
    %851 = vmatmul.mubr.bf16.gmra.mrb[0].mxu0 %v252
    %v852 = vpop.f32.mrb[0].mxu0
    %v853 = vadd.f32 %v812, %v852
    %v854 = vpop.f32.mrb[0].mxu0
    %v855 = vpop.f32.mrb[0].mxu0
    %v856 = vadd.f32 %v815, %v855
    %v857 = vpop.f32.mrb[0].mxu0
    %858 = vdwg.mxu0
    %859 = vmatprep.subr.bf16.mxu0 0
    %860 = vmatpush1.bf16.msra.mxu0 %v681
    %861 = vmatprep.subr.bf16.mxu0 0
    %862 = vmatpush1.bf16.msra.mxu0 %v682
    %863 = vmatprep.subr.bf16.mxu0 0
    %864 = vmatpush1.bf16.msra.mxu0 %v683
    %865 = vmatprep.subr.bf16.mxu0 0
    %866 = vmatpush1.bf16.msra.mxu0 %v684
    %867 = vmatprep.subr.bf16.mxu0 0
    %868 = vmatpush1.bf16.msra.mxu0 %v685
    %869 = vmatprep.subr.bf16.mxu0 0
    %870 = vmatpush1.bf16.msra.mxu0 %v686
    %871 = vmatprep.subr.bf16.mxu0 0
    %872 = vmatpush1.bf16.msra.mxu0 %v687
    %873 = vmatprep.subr.bf16.mxu0 0
    %874 = vmatpush1.bf16.msra.mxu0 %v688
    %875 = vmatprep.subr.bf16.mxu0 0
    %876 = vmatpush1.bf16.msra.mxu0 %v689
    %877 = vmatprep.subr.bf16.mxu0 0
    %878 = vmatpush1.bf16.msra.mxu0 %v690
    %879 = vmatprep.subr.bf16.mxu0 0
    %880 = vmatpush1.bf16.msra.mxu0 %v691
    %881 = vmatprep.subr.bf16.mxu0 0
    %882 = vmatpush1.bf16.msra.mxu0 %v692
    %883 = vmatprep.subr.bf16.mxu0 0
    %884 = vmatpush1.bf16.msra.mxu0 %v693
    %885 = vmatprep.subr.bf16.mxu0 0
    %886 = vmatpush1.bf16.msra.mxu0 %v694
    %887 = vmatprep.subr.bf16.mxu0 0
    %888 = vmatpush1.bf16.msra.mxu0 %v695
    %889 = vmatprep.subr.bf16.mxu0 0
    %890 = vmatpush1.bf16.msra.mxu0 %v696
    %891 = vmatprep.mubr.bf16.mxu0 %v255
    %892 = vmatmul.mubr.bf16.gmra.mrb[0].mxu0 %v254
    %v893 = vpop.f32.mrb[0].mxu0
    %v894 = vadd.f32 %v853, %v893
    %v895 = vpop.f32.mrb[0].mxu0
    %v896 = vpop.f32.mrb[0].mxu0
    %v897 = vadd.f32 %v856, %v896
    %v898 = vpop.f32.mrb[0].mxu0
    %899 = vdwg.mxu0
    %900 = vmatprep.subr.bf16.mxu0 0
    %901 = vmatpush1.bf16.msra.mxu0 %v697
    %902 = vmatprep.subr.bf16.mxu0 0
    %903 = vmatpush1.bf16.msra.mxu0 %v698
    %904 = vmatprep.subr.bf16.mxu0 0
    %905 = vmatpush1.bf16.msra.mxu0 %v699
    %906 = vmatprep.subr.bf16.mxu0 0
    %907 = vmatpush1.bf16.msra.mxu0 %v700
    %908 = vmatprep.subr.bf16.mxu0 0
    %909 = vmatpush1.bf16.msra.mxu0 %v701
    %910 = vmatprep.subr.bf16.mxu0 0
    %911 = vmatpush1.bf16.msra.mxu0 %v702
    %912 = vmatprep.subr.bf16.mxu0 0
    %913 = vmatpush1.bf16.msra.mxu0 %v703
    %914 = vmatprep.subr.bf16.mxu0 0
    %915 = vmatpush1.bf16.msra.mxu0 %v704
    %916 = vmatprep.subr.bf16.mxu0 0
    %917 = vmatpush1.bf16.msra.mxu0 %v705
    %918 = vmatprep.subr.bf16.mxu0 0
    %919 = vmatpush1.bf16.msra.mxu0 %v706
    %920 = vmatprep.subr.bf16.mxu0 0
    %921 = vmatpush1.bf16.msra.mxu0 %v707
    %922 = vmatprep.subr.bf16.mxu0 0
    %923 = vmatpush1.bf16.msra.mxu0 %v708
    %924 = vmatprep.subr.bf16.mxu0 0
    %925 = vmatpush1.bf16.msra.mxu0 %v709
    %926 = vmatprep.subr.bf16.mxu0 0
    %927 = vmatpush1.bf16.msra.mxu0 %v710
    %928 = vmatprep.subr.bf16.mxu0 0
    %929 = vmatpush1.bf16.msra.mxu0 %v711
    %930 = vmatprep.subr.bf16.mxu0 0
    %931 = vmatpush1.bf16.msra.mxu0 %v712
    %932 = vmatprep.mubr.bf16.mxu0 %v257
    %933 = vmatmul.mubr.bf16.gmra.mrb[0].mxu0 %v256
    %v934 = vpop.f32.mrb[0].mxu0
    %v935 = vadd.f32 %v894, %v934
    %v936 = vpop.f32.mrb[0].mxu0
    %v937 = vpop.f32.mrb[0].mxu0
    %v938 = vadd.f32 %v897, %v937
    %v939 = vpop.f32.mrb[0].mxu0
    %940 = vdwg.mxu0
    %vm941 = vcmp.gt.f32.partialorder %v935, 0.0
    %vm942 = vcmp.gt.f32.partialorder %v938, 0.0
    %v943 = vmul.f32 %v935, 0.01
    %v944 = vmul.f32 %v938, 0.01
    %v945 = vsel %vm941, %v935, %v943
    %v946 = vsel %vm942, %v938, %v944
    %v947 = vpack.c.bf16 %v946, %v945
    %v948 = vld [vmem:[%s4] sm:$0xff]
    %v949 = vld [vmem:[%s4 + $0x8] sm:$0xff]
    %v950 = vld [vmem:[%s4 + $0x10] sm:$0xff]
    %v951 = vld [vmem:[%s4 + $0x18] sm:$0xff]
    %v952 = vld [vmem:[%s4 + $0x20] sm:$0xff]
    %v953 = vld [vmem:[%s4 + $0x28] sm:$0xff]
    %v954 = vld [vmem:[%s4 + $0x30] sm:$0xff]
    %v955 = vld [vmem:[%s4 + $0x38] sm:$0xff]
    %v956 = vld [vmem:[%s4 + $0x40] sm:$0xff]
    %v957 = vld [vmem:[%s4 + $0x48] sm:$0xff]
    %v958 = vld [vmem:[%s4 + $0x50] sm:$0xff]
    %v959 = vld [vmem:[%s4 + $0x58] sm:$0xff]
    %v960 = vld [vmem:[%s4 + $0x60] sm:$0xff]
    %v961 = vld [vmem:[%s4 + $0x68] sm:$0xff]
    %v962 = vld [vmem:[%s4 + $0x70] sm:$0xff]
    %v963 = vld [vmem:[%s4 + $0x78] sm:$0xff]
    %v964 = vld [vmem:[%s5] sm:$0x3]
    %v966 = vlaneseq
    %v967 = vshrl.u32 %v966, 7
    %v968 = vsub.s32 0, %v967
    %v969 = vrot.slane %v964, %v968
    %v970 = vlaneseq
    %v971 = vshrl.u32 %v970, 7
    %v972 = vsub.s32 1, %v971
    %v973 = vrot.slane %v964, %v972
    %v992 = vunpack.c.l.b16 %v948
    %v993 = vunpack.c.h.b16 %v948
    %v994 = vunpack.c.l.b16 %v949
    %v995 = vunpack.c.h.b16 %v949
    %v996 = vunpack.c.l.b16 %v950
    %v997 = vunpack.c.h.b16 %v950
    %v998 = vunpack.c.l.b16 %v951
    %v999 = vunpack.c.h.b16 %v951
    %v1000 = vunpack.c.l.b16 %v952
    %v1001 = vunpack.c.h.b16 %v952
    %v1002 = vunpack.c.l.b16 %v953
    %v1003 = vunpack.c.h.b16 %v953
    %v1004 = vunpack.c.l.b16 %v954
    %v1005 = vunpack.c.h.b16 %v954
    %v1006 = vunpack.c.l.b16 %v955
    %v1007 = vunpack.c.h.b16 %v955
    %v1008 = vunpack.c.l.b16 %v956
    %v1009 = vunpack.c.h.b16 %v956
    %v1010 = vunpack.c.l.b16 %v957
    %v1011 = vunpack.c.h.b16 %v957
    %v1012 = vunpack.c.l.b16 %v958
    %v1013 = vunpack.c.h.b16 %v958
    %v1014 = vunpack.c.l.b16 %v959
    %v1015 = vunpack.c.h.b16 %v959
    %v1016 = vunpack.c.l.b16 %v960
    %v1017 = vunpack.c.h.b16 %v960
    %v1018 = vunpack.c.l.b16 %v961
    %v1019 = vunpack.c.h.b16 %v961
    %v1020 = vunpack.c.l.b16 %v962
    %v1021 = vunpack.c.h.b16 %v962
    %v1022 = vunpack.c.l.b16 %v963
    %v1023 = vunpack.c.h.b16 %v963
    %v1024 = vpack.c.b16 %v994, %v992
    %v1025 = vpack.c.b16 %v995, %v993
    %v1026 = vpack.c.b16 %v998, %v996
    %v1027 = vpack.c.b16 %v999, %v997
    %v1028 = vpack.c.b16 %v1002, %v1000
    %v1029 = vpack.c.b16 %v1003, %v1001
    %v1030 = vpack.c.b16 %v1006, %v1004
    %v1031 = vpack.c.b16 %v1007, %v1005
    %v1032 = vpack.c.b16 %v1010, %v1008
    %v1033 = vpack.c.b16 %v1011, %v1009
    %v1034 = vpack.c.b16 %v1014, %v1012
    %v1035 = vpack.c.b16 %v1015, %v1013
    %v1036 = vpack.c.b16 %v1018, %v1016
    %v1037 = vpack.c.b16 %v1019, %v1017
    %v1038 = vpack.c.b16 %v1022, %v1020
    %v1039 = vpack.c.b16 %v1023, %v1021
    %1056 = vmatprep.subr.bf16.mxu0 %v1025
    %1057 = vmatpush1.bf16.msra.mxu0 %v1024
    %1058 = vmatprep.subr.bf16.mxu0 %v1027
    %1059 = vmatpush1.bf16.msra.mxu0 %v1026
    %1060 = vmatprep.subr.bf16.mxu0 %v1029
    %1061 = vmatpush1.bf16.msra.mxu0 %v1028
    %1062 = vmatprep.subr.bf16.mxu0 %v1031
    %1063 = vmatpush1.bf16.msra.mxu0 %v1030
    %1064 = vmatprep.subr.bf16.mxu0 %v1033
    %1065 = vmatpush1.bf16.msra.mxu0 %v1032
    %1066 = vmatprep.subr.bf16.mxu0 %v1035
    %1067 = vmatpush1.bf16.msra.mxu0 %v1034
    %1068 = vmatprep.subr.bf16.mxu0 %v1037
    %1069 = vmatpush1.bf16.msra.mxu0 %v1036
    %1070 = vmatprep.subr.bf16.mxu0 %v1039
    %1071 = vmatpush1.bf16.msra.mxu0 %v1038
    %1072 = vmatprep.subr.bf16.mxu0 0
    %1073 = vmatpush1.bf16.msra.mxu0 0
    %1074 = vmatprep.subr.bf16.mxu0 0
    %1075 = vmatpush1.bf16.msra.mxu0 0
    %1076 = vmatprep.subr.bf16.mxu0 0
    %1077 = vmatpush1.bf16.msra.mxu0 0
    %1078 = vmatprep.subr.bf16.mxu0 0
    %1079 = vmatpush1.bf16.msra.mxu0 0
    %1080 = vmatprep.subr.bf16.mxu0 0
    %1081 = vmatpush1.bf16.msra.mxu0 0
    %1082 = vmatprep.subr.bf16.mxu0 0
    %1083 = vmatpush1.bf16.msra.mxu0 0
    %1084 = vmatprep.subr.bf16.mxu0 0
    %1085 = vmatpush1.bf16.msra.mxu0 0
    %1086 = vmatprep.subr.bf16.mxu0 0
    %1087 = vmatpush1.bf16.msra.mxu0 0
    %1088 = vmatprep.mubr.bf16.mxu0 0
    %1089 = vmatmul.mubr.bf16.gmra.mrb[0].mxu0 %v947
    %v1090 = vpop.f32.mrb[0].mxu0
    %v1091 = vadd.f32 %v969, %v1090
    %v1092 = vpop.f32.mrb[0].mxu0
    %v1093 = vadd.f32 %v973, %v1092
    %v1094 = vpop.f32.mrb[0].mxu0
    %v1095 = vadd.f32 %v969, %v1094
    %v1096 = vpop.f32.mrb[0].mxu0
    %v1097 = vadd.f32 %v973, %v1096
    %1098 = vdwg.mxu0
    %v1103 = vcombine.low %v1091, %v1093
    %v1104 = vcombine.high %v1091, %v1093
    %v1106 = vunpack.c.l.s4 1983009808
    %v1107 = vunpack.c.0.s8 %v1106
    %v1108 = vlaneseq
    %v1109 = vshrl.u32 %v1108, 7
    %v1110 = vsub.s32 %v1107, %v1109
    %v1111 = vrot.slane %v1103, %v1110
    %v1113 = vunpack.c.l.s4 1983009808
    %v1114 = vunpack.c.0.s8 %v1113
    %v1115 = vlaneseq
    %v1116 = vshrl.u32 %v1115, 7
    %v1117 = vsub.s32 %v1114, %v1116
    %v1118 = vrot.slane %v1104, %v1117
    %v1119 = vcombine.high %v1111, %v1111
    %v1120 = vcombine.high %v1118, %v1118
    %v1121 = vcombine.low %v1095, %v1097
    %v1122 = vcombine.high %v1095, %v1097
    %v1124 = vunpack.c.l.s4 1983009808
    %v1125 = vunpack.c.0.s8 %v1124
    %v1126 = vlaneseq
    %v1127 = vshrl.u32 %v1126, 7
    %v1128 = vsub.s32 %v1125, %v1127
    %v1129 = vrot.slane %v1121, %v1128
    %v1131 = vunpack.c.l.s4 1983009808
    %v1132 = vunpack.c.0.s8 %v1131
    %v1133 = vlaneseq
    %v1134 = vshrl.u32 %v1133, 7
    %v1135 = vsub.s32 %v1132, %v1134
    %v1136 = vrot.slane %v1122, %v1135
    %v1137 = vcombine.high %v1129, %v1129
    %v1138 = vcombine.high %v1136, %v1136
    %1147 = vst [vmem:[#allocation4] sm:$0xf] %v1111
    %1148 = vst [vmem:[#allocation4 + $0x4] sm:$0xf] %v1119
    %1149 = vst [vmem:[#allocation4 + $0x8] sm:$0xf] %v1118
    %1150 = vst [vmem:[#allocation4 + $0xc] sm:$0xf] %v1120
    %1151 = vst [vmem:[#allocation4 + $0x10] sm:$0xf] %v1129
    %1152 = vst [vmem:[#allocation4 + $0x14] sm:$0xf] %v1137
    %1153 = vst [vmem:[#allocation4 + $0x18] sm:$0xf] %v1136
    %1154 = vst [vmem:[#allocation4 + $0x1c] sm:$0xf] %v1138
    %v1155 = vmul.f32 %v1093, 0.5
    %v1156 = vmul.f32 %v1097, 0.5
    %v1157 = vmul.f32 %v1155, 1.442695
    %v1158 = vpow.pop %v1157
    %v1159 = vmul.f32 %v1156, 1.442695
    %v1160 = vpow.pop %v1159
    %v1161 = vld [vmem:[%s1] sm:$0xff]
    %v1162 = vld [vmem:[%s1 + $0x8] sm:$0xff]
    %v1163 = vmul.f32 %v1158, %v1161
    %v1164 = vmul.f32 %v1160, %v1162
    %v1165 = vadd.f32 %v1091, %v1163
    %v1166 = vadd.f32 %v1095, %v1164
    %v1167 = vpack.c.bf16 %v1166, %v1165
    %v1168 = vld [vmem:[%s6] sm:$0xf]
    %v1169 = vld [vmem:[%s6 + $0x4] sm:$0xf]
    %v1170 = vld [vmem:[%s6 + $0x8] sm:$0xf]
    %v1171 = vld [vmem:[%s6 + $0xc] sm:$0xf]
    %v1172 = vld [vmem:[%s6 + $0x10] sm:$0xf]
    %v1173 = vld [vmem:[%s6 + $0x14] sm:$0xf]
    %v1174 = vld [vmem:[%s6 + $0x18] sm:$0xf]
    %v1175 = vld [vmem:[%s6 + $0x1c] sm:$0xf]
    %v1176 = vld [vmem:[%s6 + $0x20] sm:$0xf]
    %v1177 = vld [vmem:[%s6 + $0x24] sm:$0xf]
    %v1178 = vld [vmem:[%s6 + $0x28] sm:$0xf]
    %v1179 = vld [vmem:[%s6 + $0x2c] sm:$0xf]
    %v1180 = vld [vmem:[%s6 + $0x30] sm:$0xf]
    %v1181 = vld [vmem:[%s6 + $0x34] sm:$0xf]
    %v1182 = vld [vmem:[%s6 + $0x38] sm:$0xf]
    %v1183 = vld [vmem:[%s6 + $0x3c] sm:$0xf]
    %v1184 = vld [vmem:[%s7] sm:$0x1]
    %v1186 = vlaneseq
    %v1187 = vshrl.u32 %v1186, 7
    %v1188 = vsub.s32 0, %v1187
    %v1189 = vrot.slane %v1184, %v1188
    %v1207 = vunpack.c.l.b16 %v1168
    %v1208 = vunpack.c.l.b16 %v1169
    %v1209 = vunpack.c.l.b16 %v1170
    %v1210 = vunpack.c.l.b16 %v1171
    %v1211 = vunpack.c.l.b16 %v1172
    %v1212 = vunpack.c.l.b16 %v1173
    %v1213 = vunpack.c.l.b16 %v1174
    %v1214 = vunpack.c.l.b16 %v1175
    %v1215 = vunpack.c.l.b16 %v1176
    %v1216 = vunpack.c.l.b16 %v1177
    %v1217 = vunpack.c.l.b16 %v1178
    %v1218 = vunpack.c.l.b16 %v1179
    %v1219 = vunpack.c.l.b16 %v1180
    %v1220 = vunpack.c.l.b16 %v1181
    %v1221 = vunpack.c.l.b16 %v1182
    %v1222 = vunpack.c.l.b16 %v1183
    %v1223 = vpack.c.b16 %v1208, %v1207
    %v1224 = vpack.c.b16 %v1210, %v1209
    %v1225 = vpack.c.b16 %v1212, %v1211
    %v1226 = vpack.c.b16 %v1214, %v1213
    %v1227 = vpack.c.b16 %v1216, %v1215
    %v1228 = vpack.c.b16 %v1218, %v1217
    %v1229 = vpack.c.b16 %v1220, %v1219
    %v1230 = vpack.c.b16 %v1222, %v1221
    %1239 = vmatprep.subr.bf16.mxu0 0
    %1240 = vmatpush1.bf16.msra.mxu0 %v1223
    %1241 = vmatprep.subr.bf16.mxu0 0
    %1242 = vmatpush1.bf16.msra.mxu0 %v1224
    %1243 = vmatprep.subr.bf16.mxu0 0
    %1244 = vmatpush1.bf16.msra.mxu0 %v1225
    %1245 = vmatprep.subr.bf16.mxu0 0
    %1246 = vmatpush1.bf16.msra.mxu0 %v1226
    %1247 = vmatprep.subr.bf16.mxu0 0
    %1248 = vmatpush1.bf16.msra.mxu0 %v1227
    %1249 = vmatprep.subr.bf16.mxu0 0
    %1250 = vmatpush1.bf16.msra.mxu0 %v1228
    %1251 = vmatprep.subr.bf16.mxu0 0
    %1252 = vmatpush1.bf16.msra.mxu0 %v1229
    %1253 = vmatprep.subr.bf16.mxu0 0
    %1254 = vmatpush1.bf16.msra.mxu0 %v1230
    %1255 = vmatprep.subr.bf16.mxu0 0
    %1256 = vmatpush1.bf16.msra.mxu0 0
    %1257 = vmatprep.subr.bf16.mxu0 0
    %1258 = vmatpush1.bf16.msra.mxu0 0
    %1259 = vmatprep.subr.bf16.mxu0 0
    %1260 = vmatpush1.bf16.msra.mxu0 0
    %1261 = vmatprep.subr.bf16.mxu0 0
    %1262 = vmatpush1.bf16.msra.mxu0 0
    %1263 = vmatprep.subr.bf16.mxu0 0
    %1264 = vmatpush1.bf16.msra.mxu0 0
    %1265 = vmatprep.subr.bf16.mxu0 0
    %1266 = vmatpush1.bf16.msra.mxu0 0
    %1267 = vmatprep.subr.bf16.mxu0 0
    %1268 = vmatpush1.bf16.msra.mxu0 0
    %1269 = vmatprep.subr.bf16.mxu0 0
    %1270 = vmatpush1.bf16.msra.mxu0 0
    %1271 = vmatprep.mubr.bf16.mxu0 0
    %1272 = vmatmul.mubr.bf16.gmra.mrb[0].mxu0 %v1167
    %v1273 = vpop.f32.mrb[0].mxu0
    %v1274 = vadd.f32 %v1189, %v1273
    %v1275 = vpop.f32.mrb[0].mxu0
    %v1276 = vpop.f32.mrb[0].mxu0
    %v1277 = vadd.f32 %v1189, %v1276
    %v1278 = vpop.f32.mrb[0].mxu0
    %1279 = vdwg.mxu0
    %vm1280 = vcmp.gt.f32.partialorder %v1274, 0.0
    %vm1281 = vcmp.gt.f32.partialorder %v1277, 0.0
    %v1282 = vmul.f32 %v1274, 0.01
    %v1283 = vmul.f32 %v1277, 0.01
    %v1284 = vsel %vm1280, %v1274, %v1282
    %v1285 = vsel %vm1281, %v1277, %v1283
    %v1286 = vpack.c.bf16 %v1285, %v1284
    %v1287 = vld [vmem:[%s8] sm:$0xff]
    %v1288 = vld [vmem:[%s8 + $0x8] sm:$0xff]
    %v1289 = vld [vmem:[%s8 + $0x10] sm:$0xff]
    %v1290 = vld [vmem:[%s8 + $0x18] sm:$0xff]
    %v1291 = vld [vmem:[%s8 + $0x20] sm:$0xff]
    %v1292 = vld [vmem:[%s8 + $0x28] sm:$0xff]
    %v1293 = vld [vmem:[%s8 + $0x30] sm:$0xff]
    %v1294 = vld [vmem:[%s8 + $0x38] sm:$0xff]
    %v1295 = vld [vmem:[%s8 + $0x40] sm:$0xff]
    %v1296 = vld [vmem:[%s8 + $0x48] sm:$0xff]
    %v1297 = vld [vmem:[%s8 + $0x50] sm:$0xff]
    %v1298 = vld [vmem:[%s8 + $0x58] sm:$0xff]
    %v1299 = vld [vmem:[%s8 + $0x60] sm:$0xff]
    %v1300 = vld [vmem:[%s8 + $0x68] sm:$0xff]
    %v1301 = vld [vmem:[%s8 + $0x70] sm:$0xff]
    %v1302 = vld [vmem:[%s8 + $0x78] sm:$0xff]
    %v1303 = vld [vmem:[%s9] sm:$0x3]
    %v1305 = vlaneseq
    %v1306 = vshrl.u32 %v1305, 7
    %v1307 = vsub.s32 0, %v1306
    %v1308 = vrot.slane %v1303, %v1307
    %v1309 = vlaneseq
    %v1310 = vshrl.u32 %v1309, 7
    %v1311 = vsub.s32 1, %v1310
    %v1312 = vrot.slane %v1303, %v1311
    %v1331 = vunpack.c.l.b16 %v1287
    %v1332 = vunpack.c.h.b16 %v1287
    %v1333 = vunpack.c.l.b16 %v1288
    %v1334 = vunpack.c.h.b16 %v1288
    %v1335 = vunpack.c.l.b16 %v1289
    %v1336 = vunpack.c.h.b16 %v1289
    %v1337 = vunpack.c.l.b16 %v1290
    %v1338 = vunpack.c.h.b16 %v1290
    %v1339 = vunpack.c.l.b16 %v1291
    %v1340 = vunpack.c.h.b16 %v1291
    %v1341 = vunpack.c.l.b16 %v1292
    %v1342 = vunpack.c.h.b16 %v1292
    %v1343 = vunpack.c.l.b16 %v1293
    %v1344 = vunpack.c.h.b16 %v1293
    %v1345 = vunpack.c.l.b16 %v1294
    %v1346 = vunpack.c.h.b16 %v1294
    %v1347 = vunpack.c.l.b16 %v1295
    %v1348 = vunpack.c.h.b16 %v1295
    %v1349 = vunpack.c.l.b16 %v1296
    %v1350 = vunpack.c.h.b16 %v1296
    %v1351 = vunpack.c.l.b16 %v1297
    %v1352 = vunpack.c.h.b16 %v1297
    %v1353 = vunpack.c.l.b16 %v1298
    %v1354 = vunpack.c.h.b16 %v1298
    %v1355 = vunpack.c.l.b16 %v1299
    %v1356 = vunpack.c.h.b16 %v1299
    %v1357 = vunpack.c.l.b16 %v1300
    %v1358 = vunpack.c.h.b16 %v1300
    %v1359 = vunpack.c.l.b16 %v1301
    %v1360 = vunpack.c.h.b16 %v1301
    %v1361 = vunpack.c.l.b16 %v1302
    %v1362 = vunpack.c.h.b16 %v1302
    %v1363 = vpack.c.b16 %v1333, %v1331
    %v1364 = vpack.c.b16 %v1334, %v1332
    %v1365 = vpack.c.b16 %v1337, %v1335
    %v1366 = vpack.c.b16 %v1338, %v1336
    %v1367 = vpack.c.b16 %v1341, %v1339
    %v1368 = vpack.c.b16 %v1342, %v1340
    %v1369 = vpack.c.b16 %v1345, %v1343
    %v1370 = vpack.c.b16 %v1346, %v1344
    %v1371 = vpack.c.b16 %v1349, %v1347
    %v1372 = vpack.c.b16 %v1350, %v1348
    %v1373 = vpack.c.b16 %v1353, %v1351
    %v1374 = vpack.c.b16 %v1354, %v1352
    %v1375 = vpack.c.b16 %v1357, %v1355
    %v1376 = vpack.c.b16 %v1358, %v1356
    %v1377 = vpack.c.b16 %v1361, %v1359
    %v1378 = vpack.c.b16 %v1362, %v1360
    %1395 = vmatprep.subr.bf16.mxu0 %v1364
    %1396 = vmatpush1.bf16.msra.mxu0 %v1363
    %1397 = vmatprep.subr.bf16.mxu0 %v1366
    %1398 = vmatpush1.bf16.msra.mxu0 %v1365
    %1399 = vmatprep.subr.bf16.mxu0 %v1368
    %1400 = vmatpush1.bf16.msra.mxu0 %v1367
    %1401 = vmatprep.subr.bf16.mxu0 %v1370
    %1402 = vmatpush1.bf16.msra.mxu0 %v1369
    %1403 = vmatprep.subr.bf16.mxu0 %v1372
    %1404 = vmatpush1.bf16.msra.mxu0 %v1371
    %1405 = vmatprep.subr.bf16.mxu0 %v1374
    %1406 = vmatpush1.bf16.msra.mxu0 %v1373
    %1407 = vmatprep.subr.bf16.mxu0 %v1376
    %1408 = vmatpush1.bf16.msra.mxu0 %v1375
    %1409 = vmatprep.subr.bf16.mxu0 %v1378
    %1410 = vmatpush1.bf16.msra.mxu0 %v1377
    %1411 = vmatprep.subr.bf16.mxu0 0
    %1412 = vmatpush1.bf16.msra.mxu0 0
    %1413 = vmatprep.subr.bf16.mxu0 0
    %1414 = vmatpush1.bf16.msra.mxu0 0
    %1415 = vmatprep.subr.bf16.mxu0 0
    %1416 = vmatpush1.bf16.msra.mxu0 0
    %1417 = vmatprep.subr.bf16.mxu0 0
    %1418 = vmatpush1.bf16.msra.mxu0 0
    %1419 = vmatprep.subr.bf16.mxu0 0
    %1420 = vmatpush1.bf16.msra.mxu0 0
    %1421 = vmatprep.subr.bf16.mxu0 0
    %1422 = vmatpush1.bf16.msra.mxu0 0
    %1423 = vmatprep.subr.bf16.mxu0 0
    %1424 = vmatpush1.bf16.msra.mxu0 0
    %1425 = vmatprep.subr.bf16.mxu0 0
    %1426 = vmatpush1.bf16.msra.mxu0 0
    %1427 = vmatprep.mubr.bf16.mxu0 0
    %1428 = vmatmul.mubr.bf16.gmra.mrb[0].mxu0 %v1286
    %v1429 = vpop.f32.mrb[0].mxu0
    %v1430 = vadd.f32 %v1308, %v1429
    %v1431 = vpop.f32.mrb[0].mxu0
    %v1432 = vadd.f32 %v1312, %v1431
    %v1433 = vpop.f32.mrb[0].mxu0
    %v1434 = vadd.f32 %v1308, %v1433
    %v1435 = vpop.f32.mrb[0].mxu0
    %v1436 = vadd.f32 %v1312, %v1435
    %1437 = vdwg.mxu0
    %v1438 = vmax.f32 %v1430, %v1432
    %1439 = vmax.xlane.f32.xlu0 %v1438
    %v1440 = vpop.xlane.xlu0 %1439
    %v1441 = vmax.f32 %v1434, %v1436
    %1442 = vmax.xlane.f32.xlu0 %v1441
    %v1443 = vpop.xlane.xlu0 %1442
    %v1444 = vsub.f32 %v1430, %v1440
    %v1445 = vsub.f32 %v1432, %v1440
    %v1446 = vsub.f32 %v1434, %v1443
    %v1447 = vsub.f32 %v1436, %v1443
    %v1448 = vmul.f32 %v1444, 1.442695
    %v1449 = vpow.pop %v1448
    %v1450 = vmul.f32 %v1445, 1.442695
    %v1451 = vpow.pop %v1450
    %v1452 = vmul.f32 %v1446, 1.442695
    %v1453 = vpow.pop %v1452
    %v1454 = vmul.f32 %v1447, 1.442695
    %v1455 = vpow.pop %v1454
    %v1456 = vpack.c.bf16 %v1453, %v1449
    %v1457 = vpack.c.bf16 %v1455, %v1451
    %v1458 = vld [vmem:[%s10] sm:$0xf]
    %v1459 = vld [vmem:[%s10 + $0x4] sm:$0xf]
    %v1460 = vld [vmem:[%s10 + $0x8] sm:$0xf]
    %v1461 = vld [vmem:[%s10 + $0xc] sm:$0xf]
    %v1462 = vld [vmem:[%s10 + $0x10] sm:$0xf]
    %v1463 = vld [vmem:[%s10 + $0x14] sm:$0xf]
    %v1464 = vld [vmem:[%s10 + $0x18] sm:$0xf]
    %v1465 = vld [vmem:[%s10 + $0x1c] sm:$0xf]
    %v1466 = vld [vmem:[%s10 + $0x20] sm:$0xf]
    %v1467 = vld [vmem:[%s10 + $0x24] sm:$0xf]
    %v1468 = vld [vmem:[%s10 + $0x28] sm:$0xf]
    %v1469 = vld [vmem:[%s10 + $0x2c] sm:$0xf]
    %v1470 = vld [vmem:[%s10 + $0x30] sm:$0xf]
    %v1471 = vld [vmem:[%s10 + $0x34] sm:$0xf]
    %v1472 = vld [vmem:[%s10 + $0x38] sm:$0xf]
    %v1473 = vld [vmem:[%s10 + $0x3c] sm:$0xf]
    %v1474 = vld [vmem:[%s10 + $0x40] sm:$0xf]
    %v1475 = vld [vmem:[%s10 + $0x44] sm:$0xf]
    %v1476 = vld [vmem:[%s10 + $0x48] sm:$0xf]
    %v1477 = vld [vmem:[%s10 + $0x4c] sm:$0xf]
    %v1478 = vld [vmem:[%s10 + $0x50] sm:$0xf]
    %v1479 = vld [vmem:[%s10 + $0x54] sm:$0xf]
    %v1480 = vld [vmem:[%s10 + $0x58] sm:$0xf]
    %v1481 = vld [vmem:[%s10 + $0x5c] sm:$0xf]
    %v1482 = vld [vmem:[%s10 + $0x60] sm:$0xf]
    %v1483 = vld [vmem:[%s10 + $0x64] sm:$0xf]
    %v1484 = vld [vmem:[%s10 + $0x68] sm:$0xf]
    %v1485 = vld [vmem:[%s10 + $0x6c] sm:$0xf]
    %v1486 = vld [vmem:[%s10 + $0x70] sm:$0xf]
    %v1487 = vld [vmem:[%s10 + $0x74] sm:$0xf]
    %v1488 = vld [vmem:[%s10 + $0x78] sm:$0xf]
    %v1489 = vld [vmem:[%s10 + $0x7c] sm:$0xf]
    %v1522 = vunpack.c.l.b16 %v1458
    %v1523 = vunpack.c.l.b16 %v1459
    %v1524 = vunpack.c.l.b16 %v1460
    %v1525 = vunpack.c.l.b16 %v1461
    %v1526 = vunpack.c.l.b16 %v1462
    %v1527 = vunpack.c.l.b16 %v1463
    %v1528 = vunpack.c.l.b16 %v1464
    %v1529 = vunpack.c.l.b16 %v1465
    %v1530 = vunpack.c.l.b16 %v1466
    %v1531 = vunpack.c.l.b16 %v1467
    %v1532 = vunpack.c.l.b16 %v1468
    %v1533 = vunpack.c.l.b16 %v1469
    %v1534 = vunpack.c.l.b16 %v1470
    %v1535 = vunpack.c.l.b16 %v1471
    %v1536 = vunpack.c.l.b16 %v1472
    %v1537 = vunpack.c.l.b16 %v1473
    %v1538 = vunpack.c.l.b16 %v1474
    %v1539 = vunpack.c.l.b16 %v1475
    %v1540 = vunpack.c.l.b16 %v1476
    %v1541 = vunpack.c.l.b16 %v1477
    %v1542 = vunpack.c.l.b16 %v1478
    %v1543 = vunpack.c.l.b16 %v1479
    %v1544 = vunpack.c.l.b16 %v1480
    %v1545 = vunpack.c.l.b16 %v1481
    %v1546 = vunpack.c.l.b16 %v1482
    %v1547 = vunpack.c.l.b16 %v1483
    %v1548 = vunpack.c.l.b16 %v1484
    %v1549 = vunpack.c.l.b16 %v1485
    %v1550 = vunpack.c.l.b16 %v1486
    %v1551 = vunpack.c.l.b16 %v1487
    %v1552 = vunpack.c.l.b16 %v1488
    %v1553 = vunpack.c.l.b16 %v1489
    %v1554 = vpack.c.b16 %v1523, %v1522
    %v1555 = vpack.c.b16 %v1525, %v1524
    %v1556 = vpack.c.b16 %v1527, %v1526
    %v1557 = vpack.c.b16 %v1529, %v1528
    %v1558 = vpack.c.b16 %v1531, %v1530
    %v1559 = vpack.c.b16 %v1533, %v1532
    %v1560 = vpack.c.b16 %v1535, %v1534
    %v1561 = vpack.c.b16 %v1537, %v1536
    %v1562 = vpack.c.b16 %v1539, %v1538
    %v1563 = vpack.c.b16 %v1541, %v1540
    %v1564 = vpack.c.b16 %v1543, %v1542
    %v1565 = vpack.c.b16 %v1545, %v1544
    %v1566 = vpack.c.b16 %v1547, %v1546
    %v1567 = vpack.c.b16 %v1549, %v1548
    %v1568 = vpack.c.b16 %v1551, %v1550
    %v1569 = vpack.c.b16 %v1553, %v1552
    %1586 = vmatprep.subr.bf16.mxu0 0
    %1587 = vmatpush1.bf16.msra.mxu0 %v1554
    %1588 = vmatprep.subr.bf16.mxu0 0
    %1589 = vmatpush1.bf16.msra.mxu0 %v1555
    %1590 = vmatprep.subr.bf16.mxu0 0
    %1591 = vmatpush1.bf16.msra.mxu0 %v1556
    %1592 = vmatprep.subr.bf16.mxu0 0
    %1593 = vmatpush1.bf16.msra.mxu0 %v1557
    %1594 = vmatprep.subr.bf16.mxu0 0
    %1595 = vmatpush1.bf16.msra.mxu0 %v1558
    %1596 = vmatprep.subr.bf16.mxu0 0
    %1597 = vmatpush1.bf16.msra.mxu0 %v1559
    %1598 = vmatprep.subr.bf16.mxu0 0
    %1599 = vmatpush1.bf16.msra.mxu0 %v1560
    %1600 = vmatprep.subr.bf16.mxu0 0
    %1601 = vmatpush1.bf16.msra.mxu0 %v1561
    %1602 = vmatprep.subr.bf16.mxu0 0
    %1603 = vmatpush1.bf16.msra.mxu0 %v1562
    %1604 = vmatprep.subr.bf16.mxu0 0
    %1605 = vmatpush1.bf16.msra.mxu0 %v1563
    %1606 = vmatprep.subr.bf16.mxu0 0
    %1607 = vmatpush1.bf16.msra.mxu0 %v1564
    %1608 = vmatprep.subr.bf16.mxu0 0
    %1609 = vmatpush1.bf16.msra.mxu0 %v1565
    %1610 = vmatprep.subr.bf16.mxu0 0
    %1611 = vmatpush1.bf16.msra.mxu0 %v1566
    %1612 = vmatprep.subr.bf16.mxu0 0
    %1613 = vmatpush1.bf16.msra.mxu0 %v1567
    %1614 = vmatprep.subr.bf16.mxu0 0
    %1615 = vmatpush1.bf16.msra.mxu0 %v1568
    %1616 = vmatprep.subr.bf16.mxu0 0
    %1617 = vmatpush1.bf16.msra.mxu0 %v1569
    %1618 = vmatprep.mubr.bf16.mxu0 %v1457
    %1619 = vmatmul.mubr.bf16.gmra.mrb[0].mxu0 %v1456
    %v1620 = vpop.f32.mrb[0].mxu0
    %v1621 = vadd.f32 0.0, %v1620
    %v1622 = vpop.f32.mrb[0].mxu0
    %v1623 = vpop.f32.mrb[0].mxu0
    %v1624 = vadd.f32 0.0, %v1623
    %v1625 = vpop.f32.mrb[0].mxu0
    %1626 = vdwg.mxu0
    %v1627 = vpack.c.bf16 %v1624, %v1621
    %v1628 = vld [vmem:[%s11] sm:$0xff]
    %v1629 = vld [vmem:[%s11 + $0x8] sm:$0xff]
    %v1632 = vunpack.c.l.b16 %v1628
    %v1633 = vunpack.c.h.b16 %v1628
    %v1634 = vunpack.c.l.b16 %v1629
    %v1635 = vunpack.c.h.b16 %v1629
    %v1636 = vpack.c.b16 %v1634, %v1632
    %v1637 = vpack.c.b16 %v1635, %v1633
    %vm1640 = vcmask 130048
    %v1642 = vsel %vm1640, %v1627, 0
    %1644 = vmatprep.subr.bf16.mxu0 %v1637
    %1645 = vmatpush1.bf16.msra.mxu0 %v1636
    %1646 = vmatprep.subr.bf16.mxu0 0
    %1647 = vmatpush1.bf16.msra.mxu0 0
    %1648 = vmatprep.subr.bf16.mxu0 0
    %1649 = vmatpush1.bf16.msra.mxu0 0
    %1650 = vmatprep.subr.bf16.mxu0 0
    %1651 = vmatpush1.bf16.msra.mxu0 0
    %1652 = vmatprep.subr.bf16.mxu0 0
    %1653 = vmatpush1.bf16.msra.mxu0 0
    %1654 = vmatprep.subr.bf16.mxu0 0
    %1655 = vmatpush1.bf16.msra.mxu0 0
    %1656 = vmatprep.subr.bf16.mxu0 0
    %1657 = vmatpush1.bf16.msra.mxu0 0
    %1658 = vmatprep.subr.bf16.mxu0 0
    %1659 = vmatpush1.bf16.msra.mxu0 0
    %1660 = vmatprep.subr.bf16.mxu0 0
    %1661 = vmatpush1.bf16.msra.mxu0 0
    %1662 = vmatprep.subr.bf16.mxu0 0
    %1663 = vmatpush1.bf16.msra.mxu0 0
    %1664 = vmatprep.subr.bf16.mxu0 0
    %1665 = vmatpush1.bf16.msra.mxu0 0
    %1666 = vmatprep.subr.bf16.mxu0 0
    %1667 = vmatpush1.bf16.msra.mxu0 0
    %1668 = vmatprep.subr.bf16.mxu0 0
    %1669 = vmatpush1.bf16.msra.mxu0 0
    %1670 = vmatprep.subr.bf16.mxu0 0
    %1671 = vmatpush1.bf16.msra.mxu0 0
    %1672 = vmatprep.subr.bf16.mxu0 0
    %1673 = vmatpush1.bf16.msra.mxu0 0
    %1674 = vmatprep.subr.bf16.mxu0 0
    %1675 = vmatpush1.bf16.msra.mxu0 0
    %1676 = vmatprep.mubr.bf16.mxu0 0
    %1677 = vmatmul.mubr.bf16.gmra.mrb[0].mxu0 %v1642
    %v1678 = vpop.f32.mrb[0].mxu0
    %v1679 = vadd.f32 0.0, %v1678
    %v1680 = vpop.f32.mrb[0].mxu0
    %v1681 = vadd.f32 0.0, %v1680
    %v1682 = vpop.f32.mrb[0].mxu0
    %v1683 = vadd.f32 0.0, %v1682
    %v1684 = vpop.f32.mrb[0].mxu0
    %v1685 = vadd.f32 0.0, %v1684
    %1686 = vdwg.mxu0
    %v1687 = vrcp.pop %v1679
    %v1688 = vrcp.pop %v1681
    %v1689 = vrcp.pop %v1683
    %v1690 = vrcp.pop %v1685
    %v1691 = vmul.f32 %v1449, %v1687
    %v1692 = vmul.f32 %v1451, %v1688
    %v1693 = vmul.f32 %v1453, %v1689
    %v1694 = vmul.f32 %v1455, %v1690
    %v1699 = vcombine.low %v1691, %v1692
    %v1700 = vcombine.high %v1691, %v1692
    %v1702 = vunpack.c.l.s4 1983009808
    %v1703 = vunpack.c.0.s8 %v1702
    %v1704 = vlaneseq
    %v1705 = vshrl.u32 %v1704, 7
    %v1706 = vsub.s32 %v1703, %v1705
    %v1707 = vrot.slane %v1699, %v1706
    %v1709 = vunpack.c.l.s4 1983009808
    %v1710 = vunpack.c.0.s8 %v1709
    %v1711 = vlaneseq
    %v1712 = vshrl.u32 %v1711, 7
    %v1713 = vsub.s32 %v1710, %v1712
    %v1714 = vrot.slane %v1700, %v1713
    %v1715 = vcombine.high %v1707, %v1707
    %v1716 = vcombine.high %v1714, %v1714
    %v1717 = vcombine.low %v1693, %v1694
    %v1718 = vcombine.high %v1693, %v1694
    %v1720 = vunpack.c.l.s4 1983009808
    %v1721 = vunpack.c.0.s8 %v1720
    %v1722 = vlaneseq
    %v1723 = vshrl.u32 %v1722, 7
    %v1724 = vsub.s32 %v1721, %v1723
    %v1725 = vrot.slane %v1717, %v1724
    %v1727 = vunpack.c.l.s4 1983009808
    %v1728 = vunpack.c.0.s8 %v1727
    %v1729 = vlaneseq
    %v1730 = vshrl.u32 %v1729, 7
    %v1731 = vsub.s32 %v1728, %v1730
    %v1732 = vrot.slane %v1718, %v1731
    %v1733 = vcombine.high %v1725, %v1725
    %v1734 = vcombine.high %v1732, %v1732
    %1743 = vst [vmem:[#allocation5] sm:$0xf] %v1707
    %1744 = vst [vmem:[#allocation5 + $0x4] sm:$0xf] %v1715
    %1745 = vst [vmem:[#allocation5 + $0x8] sm:$0xf] %v1714
    %1746 = vst [vmem:[#allocation5 + $0xc] sm:$0xf] %v1716
    %1747 = vst [vmem:[#allocation5 + $0x10] sm:$0xf] %v1725
    %1748 = vst [vmem:[#allocation5 + $0x14] sm:$0xf] %v1733
    %1749 = vst [vmem:[#allocation5 + $0x18] sm:$0xf] %v1732
    %1750 = vst [vmem:[#allocation5 + $0x1c] sm:$0xf] %v1734
    // Predicated region
    $region54: #{vae_forward.1} parent=1 // pred_check
      _
    $region55: #{vae_forward.1} parent=1 // pred_check_branch
      %1752 = sbr.rel (0) target = $region57
    $region56: #{vae_forward.1} parent=1 // pred_region
      // Predicated region
      $region58: #{vae_forward.1} parent=56 // pred_check
        _
      $region59: #{vae_forward.1} parent=56 // pred_check_branch
        %1754 = sbr.rel (0) target = $region61
      $region60: #{vae_forward.1} parent=56 // pred_region
        // Predicated region
        $region62: #{vae_forward.1} parent=60 // pred_check
          _
        $region63: #{vae_forward.1} parent=60 // pred_check_branch
          %1756 = sbr.rel target = $region65
        $region64: #{vae_forward.1} parent=60 // pred_region
          // Predicated region
          $region77: #{vae_forward.1} parent=64 // pred_check
            _
          $region78: #{vae_forward.1} parent=64 // pred_check_branch
            %1771 = sbr.rel (0) target = $region80
          $region79: #{vae_forward.1} parent=64 // pred_region
            loop: start=0, step=1, limit=1
            $region81: #{vae_forward.1} parent=79 // loop_pre_header
              _
            $region82: #{vae_forward.1} parent=79 // loop_header
              %s1774 = sphi 0, %s1778
              %p1775 = scmp.ge.s32.totalorder %s1774, 1
              %s1779 = sphi [#allocation4], [#allocation4]
              %s1780 = sphi %s12, %s12
            $region83: #{vae_forward.1} parent=79 // loop_header_branch
              %1777 = sbr.rel (%p1775) target = $region87
            $region84: #{vae_forward.1} parent=79 // loop_body
              %v1781 = vld [vmem:[%s1779] sm:$0xf]
              %1782 = vst [vmem:[%s1780] sm:$0xf] %v1781
            $region85: #{vae_forward.1} parent=79 // loop_footer
              %s1778 = sadd.s32 1, %s1774
            $region86: #{vae_forward.1} parent=79 // loop_footer_branch
              %1773 = sbr.rel target = $region82
            $region87: #{vae_forward.1} parent=79 // loop_exit
              _
          $region80: #{vae_forward.1} parent=64 // pred_fallthru
            _
        $region65: #{vae_forward.1} parent=60 // pred_fallthru
          _
        // Predicated region
        $region66: #{vae_forward.1} parent=60 // pred_check
          _
        $region67: #{vae_forward.1} parent=60 // pred_check_branch
          %1758 = sbr.rel (0) target = $region69
        $region68: #{vae_forward.1} parent=60 // pred_region
          loop: start=0, step=1, limit=1
          $region70: #{vae_forward.1} parent=68 // loop_pre_header
            _
          $region71: #{vae_forward.1} parent=68 // loop_header
            %s1761 = sphi 0, %s1765
            %p1762 = scmp.ge.s32.totalorder %s1761, 1
            %s1766 = sphi [#allocation4], [#allocation4]
            %s1767 = sphi %s12, %s12
          $region72: #{vae_forward.1} parent=68 // loop_header_branch
            %1764 = sbr.rel (%p1762) target = $region76
          $region73: #{vae_forward.1} parent=68 // loop_body
            %v1768 = vld [vmem:[%s1766] sm:$0xf]
            %1769 = vst [vmem:[%s1767] sm:$0xf] %v1768
          $region74: #{vae_forward.1} parent=68 // loop_footer
            %s1765 = sadd.s32 1, %s1761
          $region75: #{vae_forward.1} parent=68 // loop_footer_branch
            %1760 = sbr.rel target = $region71
          $region76: #{vae_forward.1} parent=68 // loop_exit
            _
        $region69: #{vae_forward.1} parent=60 // pred_fallthru
          _
      $region61: #{vae_forward.1} parent=56 // pred_fallthru
        _
      %1783 = vnop
    $region57: #{vae_forward.1} parent=1 // pred_fallthru
      _
    // Predicated region
    $region88: #{vae_forward.1} parent=1 // pred_check
      _
    $region89: #{vae_forward.1} parent=1 // pred_check_branch
      %1785 = sbr.rel (0) target = $region91
    $region90: #{vae_forward.1} parent=1 // pred_region
      // Predicated region
      $region92: #{vae_forward.1} parent=90 // pred_check
        _
      $region93: #{vae_forward.1} parent=90 // pred_check_branch
        %1787 = sbr.rel (0) target = $region95
      $region94: #{vae_forward.1} parent=90 // pred_region
        // Predicated region
        $region96: #{vae_forward.1} parent=94 // pred_check
          _
        $region97: #{vae_forward.1} parent=94 // pred_check_branch
          %1789 = sbr.rel target = $region99
        $region98: #{vae_forward.1} parent=94 // pred_region
          // Predicated region
          $region111: #{vae_forward.1} parent=98 // pred_check
            _
          $region112: #{vae_forward.1} parent=98 // pred_check_branch
            %1804 = sbr.rel (0) target = $region114
          $region113: #{vae_forward.1} parent=98 // pred_region
            loop: start=0, step=1, limit=1
            $region115: #{vae_forward.1} parent=113 // loop_pre_header
              _
            $region116: #{vae_forward.1} parent=113 // loop_header
              %s1807 = sphi 0, %s1811
              %p1808 = scmp.ge.s32.totalorder %s1807, 1
              %s1812 = sphi [#allocation5], [#allocation5]
              %s1813 = sphi %s13, %s13
            $region117: #{vae_forward.1} parent=113 // loop_header_branch
              %1810 = sbr.rel (%p1808) target = $region121
            $region118: #{vae_forward.1} parent=113 // loop_body
              %v1814 = vld [vmem:[%s1812] sm:$0xf]
              %1815 = vst [vmem:[%s1813] sm:$0xf] %v1814
            $region119: #{vae_forward.1} parent=113 // loop_footer
              %s1811 = sadd.s32 1, %s1807
            $region120: #{vae_forward.1} parent=113 // loop_footer_branch
              %1806 = sbr.rel target = $region116
            $region121: #{vae_forward.1} parent=113 // loop_exit
              _
          $region114: #{vae_forward.1} parent=98 // pred_fallthru
            _
        $region99: #{vae_forward.1} parent=94 // pred_fallthru
          _
        // Predicated region
        $region100: #{vae_forward.1} parent=94 // pred_check
          _
        $region101: #{vae_forward.1} parent=94 // pred_check_branch
          %1791 = sbr.rel (0) target = $region103
        $region102: #{vae_forward.1} parent=94 // pred_region
          loop: start=0, step=1, limit=1
          $region104: #{vae_forward.1} parent=102 // loop_pre_header
            _
          $region105: #{vae_forward.1} parent=102 // loop_header
            %s1794 = sphi 0, %s1798
            %p1795 = scmp.ge.s32.totalorder %s1794, 1
            %s1799 = sphi [#allocation5], [#allocation5]
            %s1800 = sphi %s13, %s13
          $region106: #{vae_forward.1} parent=102 // loop_header_branch
            %1797 = sbr.rel (%p1795) target = $region110
          $region107: #{vae_forward.1} parent=102 // loop_body
            %v1801 = vld [vmem:[%s1799] sm:$0xf]
            %1802 = vst [vmem:[%s1800] sm:$0xf] %v1801
          $region108: #{vae_forward.1} parent=102 // loop_footer
            %s1798 = sadd.s32 1, %s1794
          $region109: #{vae_forward.1} parent=102 // loop_footer_branch
            %1793 = sbr.rel target = $region105
          $region110: #{vae_forward.1} parent=102 // loop_exit
            _
        $region103: #{vae_forward.1} parent=94 // pred_fallthru
          _
      $region95: #{vae_forward.1} parent=90 // pred_fallthru
        _
      %1816 = vnop
    $region91: #{vae_forward.1} parent=1 // pred_fallthru
      _
    // Predicated region
    $region122: #{vae_forward.1} parent=1 // pred_check
      _
    $region123: #{vae_forward.1} parent=1 // pred_check_branch
      %1818 = sbr.rel (0) target = $region125
    $region124: #{vae_forward.1} parent=1 // pred_region
      _
    $region125: #{vae_forward.1} parent=1 // pred_fallthru
      _
    // Predicated region
    $region126: #{vae_forward.1} parent=1 // pred_check
      _
    $region127: #{vae_forward.1} parent=1 // pred_check_branch
      %1820 = sbr.rel (0) target = $region129
    $region128: #{vae_forward.1} parent=1 // pred_region
      _
    $region129: #{vae_forward.1} parent=1 // pred_fallthru
      _
    %1821 = vsyncpa [#allocation3], 1

</llo_original>
